<compile_context>
chip_gen: v5e
topology: v5e:2x2
jax: 0.10.0
libtpu: 0.0.40
codegen_flags: <defaults>
</compile_context>

<pallas_src>
import jax
import jax.numpy as jnp
from jax.experimental import pallas as pl
from jax.experimental.pallas import tpu as pltpu

EPS = 1e-5
COUT_P = 128  # lane-dense padded output-channel dim


def _round_up(x, m):
    return ((x + m - 1) // m) * m


def layer2_forward(x_nchw, conv_w, conv_b, bn_gamma, bn_beta):
    """x_nchw: [N, 32, H, W] f32. conv_w: [64, 32, 5, 5]. Returns NCHW [N, 64, Ho, Wo] f32."""
    N, Cin, H, W = x_nchw.shape
    Cout, _, KH, KW = conv_w.shape
    HO, WO = H - KH + 1, W - KW + 1
    KC = KW * Cin                                   # 160: per-tap K depth

    # Rows computed per image: q = h*W + w, h-major over full W (columns
    # w >= WO are garbage, masked from stats and sliced off at the end).
    R_OUT = _round_up(HO * W, 8)
    R_IN = _round_up(max(H * W, R_OUT + (KH - 1) * W), 8)

    # --- cheap XLA-side layout prep (KW taps only; no 25x im2col inflation) --
    # NCHW -> NHWC (bf16), zero-pad W by KW-1, gather the KW horizontal taps
    # into the channel dim: x_taps[n, h*W+w, j*Cin+c] = x[n, h, w+j, c].
    x_nhwc = jnp.transpose(x_nchw, (0, 2, 3, 1)).astype(jnp.bfloat16)
    x_wpad = jnp.pad(x_nhwc, ((0, 0), (0, 0), (0, KW - 1), (0, 0)))
    taps = jnp.concatenate([x_wpad[:, :, j:j + W, :] for j in range(KW)], axis=-1)
    x_taps = taps.reshape(N, H * W, KC)
    if R_IN > H * W:
        x_taps = jnp.pad(x_taps, ((0, 0), (0, R_IN - H * W), (0, 0)))

    # Conv weight [Cout,Cin,KH,KW] -> [(i, j, cin), Cout] bf16, padded to 128 lanes.
    w2d = jnp.transpose(conv_w, (2, 3, 1, 0)).reshape(KH * KW * Cin, Cout)
    w2d = jnp.pad(w2d, ((0, 0), (0, COUT_P - Cout))).astype(jnp.bfloat16)
    b2d = jnp.pad(conv_b.reshape(1, Cout).astype(jnp.float32),
                  ((0, 0), (0, COUT_P - Cout)))

    # --- kernel: conv (KH deep-K matmuls) + bias + ReLU + partial BN stats ----
    def conv_relu_stats_kernel(x_ref, w_ref, b_ref, y_ref, stat_ref):
        acc = None
        for i in range(KH):
            off = i * W                              # multiple of 8 -> aligned view
            lhs = x_ref[off:off + R_OUT, :]          # [R_OUT, KC] bf16
            rhs = w_ref[i * KC:(i + 1) * KC, :]      # [KC, COUT_P] bf16
            part = jnp.dot(lhs, rhs, preferred_element_type=jnp.float32)
            acc = part if acc is None else acc + part
        y = jnp.maximum(acc + b_ref[...], 0.0)       # bias + ReLU, f32
        y_ref[...] = y.astype(jnp.bfloat16)
        # masked per-image partial stats (valid output positions only)
        col = jax.lax.broadcasted_iota(jnp.int32, (R_OUT, 1), 0)
        valid = (col % W) < WO
        if R_OUT > HO * W:                           # static; false for these shapes
            valid = valid & (col < HO * W)
        yv = y * valid.astype(jnp.float32)
        stat_ref[...] = jnp.concatenate(
            [jnp.sum(yv, axis=0, keepdims=True),         # sum(y)
             jnp.sum(yv * yv, axis=0, keepdims=True)],   # sum(y^2)
            axis=0)

    y_full, part_stats = pl.pallas_call(
        conv_relu_stats_kernel,
        out_shape=(
            jax.ShapeDtypeStruct((N, R_OUT, COUT_P), jnp.bfloat16),
            jax.ShapeDtypeStruct((N, 2, COUT_P), jnp.float32),
        ),
        grid=(N,),
        in_specs=[
            pl.BlockSpec((None, R_IN, KC), lambda n: (n, 0, 0)),
            pl.BlockSpec((KH * KW * Cin, COUT_P), lambda n: (0, 0)),
            pl.BlockSpec((1, COUT_P), lambda n: (0, 0)),
        ],
        out_specs=(
            pl.BlockSpec((None, R_OUT, COUT_P), lambda n: (n, 0, 0)),
            pl.BlockSpec((None, 2, COUT_P), lambda n: (n, 0, 0)),
        ),
        compiler_params=pltpu.CompilerParams(
            dimension_semantics=("parallel",),
            vmem_limit_bytes=32 * 1024 * 1024,
        ),
    )(x_taps, w2d, b2d)

    # --- tiny XLA reduction: fold BN into one scale/shift ---------------------
    count = jnp.float32(N * HO * WO)
    totals = jnp.sum(part_stats, axis=0)[:, :Cout]            # [2, Cout]
    mean = totals[0] / count
    var = jnp.maximum(totals[1] / count - mean * mean, 0.0)   # biased, clamped
    scale = bn_gamma * jax.lax.rsqrt(var + EPS)
    shift = bn_beta - mean * scale

    # --- epilogue: BN apply fused by XLA with slice/reshape/transpose ---------
    y = y_full[:, :HO * W, :Cout].astype(jnp.float32)         # [N, HO*W, Cout]
    y = y * scale[None, None, :] + shift[None, None, :]
    out = y.reshape(N, HO, W, Cout)[:, :, :WO, :]             # [N, HO, WO, Cout]
    return jnp.transpose(out, (0, 3, 1, 2))                   # NCHW


def _reference(x, w, b, gamma, beta):
    y = jax.lax.conv_general_dilated(
        x, w, window_strides=(1, 1), padding="VALID",
        dimension_numbers=("NCHW", "OIHW", "NCHW"),
        precision=jax.lax.Precision.HIGHEST)
    y = y + b[None, :, None, None]
    y = jnp.maximum(y, 0.0)
    mean = jnp.mean(y, axis=(0, 2, 3), keepdims=True)
    var = jnp.mean((y - mean) ** 2, axis=(0, 2, 3), keepdims=True)
    return ((y - mean) * jax.lax.rsqrt(var + EPS) * gamma[None, :, None, None]
            + beta[None, :, None, None])


if __name__ == "__main__":
    key = jax.random.PRNGKey(0)
    k_x, k_w, k_b = jax.random.split(key, 3)

    # Small shapes consistent with the module: N=2, Cin=32, 16x16 spatial.
    x = jax.random.normal(k_x, (2, 32, 16, 16), dtype=jnp.float32)

    fan_in = 32 * 5 * 5
    conv_w = jax.random.normal(k_w, (64, 32, 5, 5), dtype=jnp.float32) * (fan_in ** -0.5)
    conv_b = jax.random.normal(k_b, (64,), dtype=jnp.float32) * 0.01
    bn_gamma = jnp.ones((64,), dtype=jnp.float32)
    bn_beta = jnp.zeros((64,), dtype=jnp.float32)

    fwd = jax.jit(layer2_forward)
    y = fwd(x, conv_w, conv_b, bn_gamma, bn_beta)
    jax.block_until_ready(y)
    assert y.shape == (2, 64, 12, 12), y.shape

    y_ref = _reference(x, conv_w, conv_b, bn_gamma, bn_beta)
    err = float(jnp.max(jnp.abs(y - y_ref)))
    assert err < 1e-1, f"max abs err {err}"
    print("KERNEL_OK")
</pallas_src>

<mosaic_0001>
module attributes {stable_mosaic.version = 11 : i64} {
  func.func @conv_relu_stats_kernel(%arg0: i32, %arg1: memref<1x256x160xbf16, #tpu.memory_space<vmem>>, %arg2: memref<800x128xbf16, #tpu.memory_space<vmem>>, %arg3: memref<1x128xf32, #tpu.memory_space<vmem>>, %arg4: memref<1x192x128xbf16, #tpu.memory_space<vmem>>, %arg5: memref<1x2x128xf32, #tpu.memory_space<vmem>>) attributes {dimension_semantics = [#tpu.dimension_semantics<parallel>], iteration_bounds = array<i64: 2>, scalar_prefetch = 0 : i64, scratch_operands = 0 : i64, tpu.core_type = #tpu.core_type<tc>, window_params = [{transform_indices = @transform_0, window_bounds = array<i64: 1, 256, 160>}, {pipeline_mode = #tpu.pipeline_mode<synchronous>, transform_indices = @transform_1, window_bounds = array<i64: 800, 128>}, {pipeline_mode = #tpu.pipeline_mode<synchronous>, transform_indices = @transform_2, window_bounds = array<i64: 1, 128>}, {transform_indices = @transform_3, window_bounds = array<i64: 1, 192, 128>}, {transform_indices = @transform_4, window_bounds = array<i64: 1, 2, 128>}]} {
    %c0 = arith.constant 0 : index
    %c0_0 = arith.constant 0 : index
    %c0_1 = arith.constant 0 : index
    %0 = vector.load %arg1[%c0, %c0_0, %c0_1] : memref<1x256x160xbf16, #tpu.memory_space<vmem>>, vector<1x192x160xbf16>
    %1 = vector.shape_cast %0 : vector<1x192x160xbf16> to vector<192x160xbf16>
    %c0_2 = arith.constant 0 : index
    %c0_3 = arith.constant 0 : index
    %2 = vector.load %arg2[%c0_2, %c0_3] : memref<800x128xbf16, #tpu.memory_space<vmem>>, vector<160x128xbf16>
    %cst = arith.constant dense<0.000000e+00> : vector<192x128xf32>
    %3 = tpu.matmul %1, %2, %cst {dimension_numbers = #tpu.dot_dimension_numbers<[1], [0], [0], [1], [0, 0, 1, 1], [], []>} : vector<192x160xbf16>, vector<160x128xbf16>, vector<192x128xf32> -> vector<192x128xf32>
    %c0_4 = arith.constant 0 : index
    %c16 = arith.constant 16 : index
    %c0_5 = arith.constant 0 : index
    %4 = vector.load %arg1[%c0_4, %c16, %c0_5] : memref<1x256x160xbf16, #tpu.memory_space<vmem>>, vector<1x192x160xbf16>
    %5 = vector.shape_cast %4 : vector<1x192x160xbf16> to vector<192x160xbf16>
    %c160 = arith.constant 160 : index
    %c0_6 = arith.constant 0 : index
    %6 = vector.load %arg2[%c160, %c0_6] : memref<800x128xbf16, #tpu.memory_space<vmem>>, vector<160x128xbf16>
    %cst_7 = arith.constant dense<0.000000e+00> : vector<192x128xf32>
    %7 = tpu.matmul %5, %6, %cst_7 {dimension_numbers = #tpu.dot_dimension_numbers<[1], [0], [0], [1], [0, 0, 1, 1], [], []>} : vector<192x160xbf16>, vector<160x128xbf16>, vector<192x128xf32> -> vector<192x128xf32>
    %8 = arith.addf %3, %7 : vector<192x128xf32>
    %c0_8 = arith.constant 0 : index
    %c32 = arith.constant 32 : index
    %c0_9 = arith.constant 0 : index
    %9 = vector.load %arg1[%c0_8, %c32, %c0_9] : memref<1x256x160xbf16, #tpu.memory_space<vmem>>, vector<1x192x160xbf16>
    %10 = vector.shape_cast %9 : vector<1x192x160xbf16> to vector<192x160xbf16>
    %c320 = arith.constant 320 : index
    %c0_10 = arith.constant 0 : index
    %11 = vector.load %arg2[%c320, %c0_10] : memref<800x128xbf16, #tpu.memory_space<vmem>>, vector<160x128xbf16>
    %cst_11 = arith.constant dense<0.000000e+00> : vector<192x128xf32>
    %12 = tpu.matmul %10, %11, %cst_11 {dimension_numbers = #tpu.dot_dimension_numbers<[1], [0], [0], [1], [0, 0, 1, 1], [], []>} : vector<192x160xbf16>, vector<160x128xbf16>, vector<192x128xf32> -> vector<192x128xf32>
    %13 = arith.addf %8, %12 : vector<192x128xf32>
    %c0_12 = arith.constant 0 : index
    %c48 = arith.constant 48 : index
    %c0_13 = arith.constant 0 : index
    %14 = vector.load %arg1[%c0_12, %c48, %c0_13] : memref<1x256x160xbf16, #tpu.memory_space<vmem>>, vector<1x192x160xbf16>
    %15 = vector.shape_cast %14 : vector<1x192x160xbf16> to vector<192x160xbf16>
    %c480 = arith.constant 480 : index
    %c0_14 = arith.constant 0 : index
    %16 = vector.load %arg2[%c480, %c0_14] : memref<800x128xbf16, #tpu.memory_space<vmem>>, vector<160x128xbf16>
    %cst_15 = arith.constant dense<0.000000e+00> : vector<192x128xf32>
    %17 = tpu.matmul %15, %16, %cst_15 {dimension_numbers = #tpu.dot_dimension_numbers<[1], [0], [0], [1], [0, 0, 1, 1], [], []>} : vector<192x160xbf16>, vector<160x128xbf16>, vector<192x128xf32> -> vector<192x128xf32>
    %18 = arith.addf %13, %17 : vector<192x128xf32>
    %c0_16 = arith.constant 0 : index
    %c64 = arith.constant 64 : index
    %c0_17 = arith.constant 0 : index
    %19 = vector.load %arg1[%c0_16, %c64, %c0_17] : memref<1x256x160xbf16, #tpu.memory_space<vmem>>, vector<1x192x160xbf16>
    %20 = vector.shape_cast %19 : vector<1x192x160xbf16> to vector<192x160xbf16>
    %c640 = arith.constant 640 : index
    %c0_18 = arith.constant 0 : index
    %21 = vector.load %arg2[%c640, %c0_18] : memref<800x128xbf16, #tpu.memory_space<vmem>>, vector<160x128xbf16>
    %cst_19 = arith.constant dense<0.000000e+00> : vector<192x128xf32>
    %22 = tpu.matmul %20, %21, %cst_19 {dimension_numbers = #tpu.dot_dimension_numbers<[1], [0], [0], [1], [0, 0, 1, 1], [], []>} : vector<192x160xbf16>, vector<160x128xbf16>, vector<192x128xf32> -> vector<192x128xf32>
    %23 = arith.addf %18, %22 : vector<192x128xf32>
    %c0_20 = arith.constant 0 : index
    %c0_21 = arith.constant 0 : index
    %24 = vector.load %arg3[%c0_20, %c0_21] : memref<1x128xf32, #tpu.memory_space<vmem>>, vector<1x128xf32>
    %25 = vector.broadcast %24 : vector<1x128xf32> to vector<192x128xf32>
    %26 = arith.addf %23, %25 : vector<192x128xf32>
    %cst_22 = arith.constant 0.000000e+00 : f32
    %27 = vector.broadcast %cst_22 : f32 to vector<192x128xf32>
    %28 = arith.maximumf %26, %27 : vector<192x128xf32>
    %29 = arith.truncf %28 : vector<192x128xf32> to vector<192x128xbf16>
    %c0_23 = arith.constant 0 : index
    %c0_24 = arith.constant 0 : index
    %c0_25 = arith.constant 0 : index
    %30 = vector.load %arg4[%c0_23, %c0_24, %c0_25] : memref<1x192x128xbf16, #tpu.memory_space<vmem>>, vector<1x192x128xbf16>
    %31 = vector.shape_cast %30 : vector<1x192x128xbf16> to vector<192x128xbf16>
    %32 = vector.shape_cast %29 : vector<192x128xbf16> to vector<1x192x128xbf16>
    tpu.vector_store %arg4[%c0_23, %c0_24, %c0_25], %32 {strides = array<i32>} : memref<1x192x128xbf16, #tpu.memory_space<vmem>>, vector<1x192x128xbf16>,
    %33 = tpu.iota {dimensions = array<i32: 0>} : vector<192x1xi32>
    %c16_i32 = arith.constant 16 : i32
    %c0_i32 = arith.constant 0 : i32
    %34 = arith.cmpi eq, %c16_i32, %c0_i32 : i32
    %c1_i32 = arith.constant 1 : i32
    %35 = arith.select %34, %c1_i32, %c16_i32 : i32
    %36 = vector.broadcast %35 : i32 to vector<192x1xi32>
    %37 = arith.remsi %33, %36 : vector<192x1xi32>
    %c0_i32_26 = arith.constant 0 : i32
    %38 = vector.broadcast %c0_i32_26 : i32 to vector<192x1xi32>
    %39 = arith.cmpi ne, %37, %38 : vector<192x1xi32>
    %c0_i32_27 = arith.constant 0 : i32
    %40 = vector.broadcast %c0_i32_27 : i32 to vector<192x1xi32>
    %41 = arith.cmpi slt, %37, %40 : vector<192x1xi32>
    %c0_i32_28 = arith.constant 0 : i32
    %42 = arith.cmpi slt, %35, %c0_i32_28 : i32
    %43 = vector.broadcast %42 : i1 to vector<192x1xi1>
    %44 = vector.broadcast %43 : vector<192x1xi1> to vector<192x1xi1>
    %45 = arith.xori %41, %44 : vector<192x1xi1>
    %46 = arith.andi %45, %39 : vector<192x1xi1>
    %47 = vector.broadcast %35 : i32 to vector<192x1xi32>
    %48 = arith.addi %37, %47 : vector<192x1xi32>
    %49 = arith.select %46, %48, %37 : vector<192x1xi1>, vector<192x1xi32>
    %c12_i32 = arith.constant 12 : i32
    %50 = vector.broadcast %c12_i32 : i32 to vector<192x1xi32>
    %51 = arith.cmpi slt, %49, %50 : vector<192x1xi32>
    %52 = arith.extui %51 : vector<192x1xi1> to vector<192x1xi32>
    %53 = arith.sitofp %52 : vector<192x1xi32> to vector<192x1xf32>
    %54 = vector.broadcast %53 : vector<192x1xf32> to vector<192x128xf32>
    %55 = arith.mulf %28, %54 : vector<192x128xf32>
    %cst_29 = arith.constant dense<0.000000e+00> : vector<128xf32>
    %56 = vector.multi_reduction <add>, %55, %cst_29 [0] : vector<192x128xf32> to vector<128xf32>
    %57 = vector.shape_cast %56 : vector<128xf32> to vector<1x128xf32>
    %58 = arith.mulf %55, %55 : vector<192x128xf32>
    %cst_30 = arith.constant dense<0.000000e+00> : vector<128xf32>
    %59 = vector.multi_reduction <add>, %58, %cst_30 [0] : vector<192x128xf32> to vector<128xf32>
    %60 = vector.shape_cast %59 : vector<128xf32> to vector<1x128xf32>
    %61 = tpu.concatenate %57, %60 in 0 : vector<1x128xf32>, vector<1x128xf32> -> vector<2x128xf32>
    %c0_31 = arith.constant 0 : index
    %c0_32 = arith.constant 0 : index
    %c0_33 = arith.constant 0 : index
    %62 = vector.load %arg5[%c0_31, %c0_32, %c0_33] : memref<1x2x128xf32, #tpu.memory_space<vmem>>, vector<1x2x128xf32>
    %63 = vector.shape_cast %62 : vector<1x2x128xf32> to vector<2x128xf32>
    %64 = vector.shape_cast %61 : vector<2x128xf32> to vector<1x2x128xf32>
    tpu.vector_store %arg5[%c0_31, %c0_32, %c0_33], %64 {strides = array<i32>} : memref<1x2x128xf32, #tpu.memory_space<vmem>>, vector<1x2x128xf32>,
    return
  }
  func.func @transform_0(%arg0: i32) -> (i32, i32, i32) {
    %c0_i32 = arith.constant 0 : i32
    %c0_i32_0 = arith.constant 0 : i32
    %c0_i32_1 = arith.constant 0 : i32
    return %arg0, %c0_i32, %c0_i32_0 : i32, i32, i32
  }
  func.func @transform_1(%arg0: i32) -> (i32, i32) {
    %c0_i32 = arith.constant 0 : i32
    %c0_i32_0 = arith.constant 0 : i32
    %c0_i32_1 = arith.constant 0 : i32
    return %c0_i32, %c0_i32_0 : i32, i32
  }
  func.func @transform_2(%arg0: i32) -> (i32, i32) {
    %c0_i32 = arith.constant 0 : i32
    %c0_i32_0 = arith.constant 0 : i32
    %c0_i32_1 = arith.constant 0 : i32
    return %c0_i32, %c0_i32_0 : i32, i32
  }
  func.func @transform_3(%arg0: i32) -> (i32, i32, i32) {
    %c0_i32 = arith.constant 0 : i32
    %c0_i32_0 = arith.constant 0 : i32
    %c0_i32_1 = arith.constant 0 : i32
    return %arg0, %c0_i32, %c0_i32_0 : i32, i32, i32
  }
  func.func @transform_4(%arg0: i32) -> (i32, i32, i32) {
    %c0_i32 = arith.constant 0 : i32
    %c0_i32_0 = arith.constant 0 : i32
    %c0_i32_1 = arith.constant 0 : i32
    return %arg0, %c0_i32, %c0_i32_0 : i32, i32, i32
  }
}

</mosaic_0001>

<llo_original>
// kernel: layer2_forward.1
$region0: #{layer2_forward.1}
  #allocation0 [shape = 'u32[]', space=smem, size = 0x4, offset = 0x4, fixed_abs, tag = 'smem constant byte address 0x4 - core index']
  #allocation1 [shape = 'u32[72,128]{1,0:T(1,128)}', space=vmem, size = 0x9000, scoped, tag = 'internal scratch']
  %s0 = inlined_call_operand.vmem [shape: bf16[2,256,160], index: 0, kind: input, shape index: {}]
  %s1 = inlined_call_operand.vmem [shape: bf16[800,128], index: 1, kind: input, shape index: {}]
  %s2 = inlined_call_operand.vmem [shape: f32[1,128], index: 2, kind: input, shape index: {}]
  %s3 = inlined_call_operand.vmem [shape: bf16[2,192,128], index: 3, kind: output, shape index: {0}]
  %s4 = inlined_call_operand.vmem [shape: f32[2,2,128], index: 4, kind: output, shape index: {1}]
  %5 = xla_tuple %s3, %s4
  %s6 = sld [smem:[#allocation0]]
  $region53: #{layer2_forward.1} parent=0
    _
  %s8 = ssub.s32 1, %s6
  %s9 = scalar_select 0, %s8, %s6
  loop: start=0, step=1, limit=4
  $region2: #{layer2_forward.1} parent=0 // loop_pre_header
    _
  $region3: #{layer2_forward.1} parent=0 // loop_header
    %s11 = sphi 0, %s15
    %p12 = scmp.ge.s32.totalorder %s11, 4
    %s21 = sphi 0, %s23
    %s24 = sphi 0, %s21
    %s25 = sphi 0, %s24
    %s41 = sphi 0, %s25
    %s45 = sphi 0, %s45
    %s47 = sphi 0, %s45
    %s48 = sphi 0, %s47
    %s62 = sphi 0, %s48
    %s66 = sphi 0, %s66
    %s68 = sphi 0, %s66
    %s69 = sphi 0, %s68
    %s83 = sphi 0, %s69
    %s89 = sphi 0, %s91
    %s92 = sphi 0, %s89
    %s93 = sphi 0, %s92
    %s109 = sphi 0, %s93
    %s115 = sphi 0, %s117
    %s118 = sphi 0, %s115
    %s119 = sphi 0, %s118
    %s135 = sphi 0, %s119
  $region4: #{layer2_forward.1} parent=0 // loop_header_branch
    %14 = sbr.rel (%p12) target = $region8
  $region5: #{layer2_forward.1} parent=0 // loop_body
    %s16 = ssub.s32 %s11, 1
    %s17 = ssub.s32 %s11, 2
    %s18 = sadd.s32 %s11, 1
    %s19 = ssub.s32 %s11, %s18
    %p20 = scmp.eq.s32.totalorder %s19, 0
    %s22 = sadd.s32 %s21, 1
    %s23 = scalar_select %p20, %s21, %s22
    %p26 = pneg %p20
    %p27 = scmp.eq.s32.totalorder %s11, 1
    %p28 = por %p26, %p27
    %p29 = scmp.ne.s32.totalorder %s21, %s24
    %p30 = scmp.eq.s32.totalorder %s11, 0
    %p31 = por %p29, %p30
    %p32 = scmp.ne.s32.totalorder %s21, %s24
    %p33 = scmp.eq.s32.totalorder %s16, 1
    %p34 = por %p32, %p33
    %p35 = scmp.ne.s32.totalorder %s24, %s25
    %p36 = scmp.eq.s32.totalorder %s16, 0
    %p37 = por %p35, %p36
    %p38 = scmp.ne.s32.totalorder %s24, %s25
    %p39 = scmp.eq.s32.totalorder %s17, 1
    %p40 = por %p38, %p39
    %p42 = scmp.ne.s32.totalorder %s25, %s41
    %p43 = scmp.eq.s32.totalorder %s17, 0
    %p44 = por %p42, %p43
    %s46 = sadd.s32 %s45, 1
    %p49 = scmp.eq.s32.totalorder %s11, 1
    %p50 = scmp.ne.s32.totalorder %s45, %s47
    %p51 = scmp.eq.s32.totalorder %s11, 0
    %p52 = por %p50, %p51
    %p53 = scmp.ne.s32.totalorder %s45, %s47
    %p54 = scmp.eq.s32.totalorder %s16, 1
    %p55 = por %p53, %p54
    %p56 = scmp.ne.s32.totalorder %s47, %s48
    %p57 = scmp.eq.s32.totalorder %s16, 0
    %p58 = por %p56, %p57
    %p59 = scmp.ne.s32.totalorder %s47, %s48
    %p60 = scmp.eq.s32.totalorder %s17, 1
    %p61 = por %p59, %p60
    %p63 = scmp.ne.s32.totalorder %s48, %s62
    %p64 = scmp.eq.s32.totalorder %s17, 0
    %p65 = por %p63, %p64
    %s67 = sadd.s32 %s66, 1
    %p70 = scmp.eq.s32.totalorder %s11, 1
    %p71 = scmp.ne.s32.totalorder %s66, %s68
    %p72 = scmp.eq.s32.totalorder %s11, 0
    %p73 = por %p71, %p72
    %p74 = scmp.ne.s32.totalorder %s66, %s68
    %p75 = scmp.eq.s32.totalorder %s16, 1
    %p76 = por %p74, %p75
    %p77 = scmp.ne.s32.totalorder %s68, %s69
    %p78 = scmp.eq.s32.totalorder %s16, 0
    %p79 = por %p77, %p78
    %p80 = scmp.ne.s32.totalorder %s68, %s69
    %p81 = scmp.eq.s32.totalorder %s17, 1
    %p82 = por %p80, %p81
    %p84 = scmp.ne.s32.totalorder %s69, %s83
    %p85 = scmp.eq.s32.totalorder %s17, 0
    %p86 = por %p84, %p85
    %s87 = ssub.s32 %s11, %s18
    %p88 = scmp.eq.s32.totalorder %s87, 0
    %s90 = sadd.s32 %s89, 1
    %s91 = scalar_select %p88, %s89, %s90
    %p94 = pneg %p88
    %p95 = scmp.eq.s32.totalorder %s11, 1
    %p96 = por %p94, %p95
    %p97 = scmp.ne.s32.totalorder %s89, %s92
    %p98 = scmp.eq.s32.totalorder %s11, 0
    %p99 = por %p97, %p98
    %p100 = scmp.ne.s32.totalorder %s89, %s92
    %p101 = scmp.eq.s32.totalorder %s16, 1
    %p102 = por %p100, %p101
    %p103 = scmp.ne.s32.totalorder %s92, %s93
    %p104 = scmp.eq.s32.totalorder %s16, 0
    %p105 = por %p103, %p104
    %p106 = scmp.ne.s32.totalorder %s92, %s93
    %p107 = scmp.eq.s32.totalorder %s17, 1
    %p108 = por %p106, %p107
    %p110 = scmp.ne.s32.totalorder %s93, %s109
    %p111 = scmp.eq.s32.totalorder %s17, 0
    %p112 = por %p110, %p111
    %s113 = ssub.s32 %s11, %s18
    %p114 = scmp.eq.s32.totalorder %s113, 0
    %s116 = sadd.s32 %s115, 1
    %s117 = scalar_select %p114, %s115, %s116
    %p120 = pneg %p114
    %p121 = scmp.eq.s32.totalorder %s11, 1
    %p122 = por %p120, %p121
    %p123 = scmp.ne.s32.totalorder %s115, %s118
    %p124 = scmp.eq.s32.totalorder %s11, 0
    %p125 = por %p123, %p124
    %p126 = scmp.ne.s32.totalorder %s115, %s118
    %p127 = scmp.eq.s32.totalorder %s16, 1
    %p128 = por %p126, %p127
    %p129 = scmp.ne.s32.totalorder %s118, %s119
    %p130 = scmp.eq.s32.totalorder %s16, 0
    %p131 = por %p129, %p130
    %p132 = scmp.ne.s32.totalorder %s118, %s119
    %p133 = scmp.eq.s32.totalorder %s17, 1
    %p134 = por %p132, %p133
    %p136 = scmp.ne.s32.totalorder %s119, %s135
    %p137 = scmp.eq.s32.totalorder %s17, 0
    %p138 = por %p136, %p137
    %p139 = scmp.le.s32.totalorder 1, %s11
    %p140 = scmp.lt.s32.totalorder %s11, 3
    %p141 = pnand %p139, %p140
    %p142 = pneg %p141
    // Predicated region
    $region9: #{layer2_forward.1} parent=5 // pred_check
      _
    $region10: #{layer2_forward.1} parent=5 // pred_check_branch
      %144 = sbr.rel (%p141) target = $region12
    $region11: #{layer2_forward.1} parent=5 // pred_region
      %s145 = ssub.s32 %s11, 1
      // Predicated region
      $region13: #{layer2_forward.1} parent=11 // pred_check
        %p146 = pneg %p58
      $region14: #{layer2_forward.1} parent=11 // pred_check_branch
        %148 = sbr.rel (%p146) target = $region16
      $region15: #{layer2_forward.1} parent=11 // pred_region
        _
      $region16: #{layer2_forward.1} parent=11 // pred_fallthru
        _
      // Predicated region
      $region17: #{layer2_forward.1} parent=11 // pred_check
        %p149 = pneg %p79
      $region18: #{layer2_forward.1} parent=11 // pred_check_branch
        %151 = sbr.rel (%p149) target = $region20
      $region19: #{layer2_forward.1} parent=11 // pred_region
        _
      $region20: #{layer2_forward.1} parent=11 // pred_fallthru
        _
    $region12: #{layer2_forward.1} parent=5 // pred_fallthru
      _
    %p152 = scmp.lt.s32.totalorder %s11, 2
    // Predicated region
    $region21: #{layer2_forward.1} parent=5 // pred_check
      %p153 = pneg %p152
    $region22: #{layer2_forward.1} parent=5 // pred_check_branch
      %155 = sbr.rel (%p153) target = $region24
    $region23: #{layer2_forward.1} parent=5 // pred_region
      // Predicated region
      $region25: #{layer2_forward.1} parent=23 // pred_check
        %p156 = pneg %p31
      $region26: #{layer2_forward.1} parent=23 // pred_check_branch
        %158 = sbr.rel (%p156) target = $region28
      $region27: #{layer2_forward.1} parent=23 // pred_region
        %p159 = scmp.lt.s32.totalorder %s11, 1
        %s160 = scalar_select %p159, %s11, 1
        %s161 = smul.addr %s160, 64
        %s162 = smul.addr %s161, 4
        %s163 = scalar_lea.vmem %s0, %s162
      $region28: #{layer2_forward.1} parent=23 // pred_fallthru
        _
    $region24: #{layer2_forward.1} parent=5 // pred_fallthru
      _
    %p164 = scmp.le.s32.totalorder 1, %s11
    %p165 = scmp.lt.s32.totalorder %s11, 3
    %p166 = pnand %p164, %p165
    %p167 = pneg %p166
    // Predicated region
    $region29: #{layer2_forward.1} parent=5 // pred_check
      _
    $region30: #{layer2_forward.1} parent=5 // pred_check_branch
      %169 = sbr.rel (%p166) target = $region32
    $region31: #{layer2_forward.1} parent=5 // pred_region
      %s170 = ssub.s32 %s11, 1
      %p171 = scmp.lt.s32.totalorder %s16, 1
      %s172 = scalar_select %p171, %s16, 1
      %s173 = smul.addr %s172, 64
      %s174 = smul.addr %s173, 4
      %s175 = scalar_lea.vmem %s0, %s174
      %p176 = pneg %p37
      %p177 = pneg %p34
      %p178 = pneg %p58
      %p179 = pneg %p55
      %p180 = pneg %p79
      %p181 = pneg %p76
      %p182 = pneg %p105
      %p183 = pneg %p102
      %p184 = scmp.lt.s32.totalorder %s16, 1
      %s185 = scalar_select %p184, %s16, 1
      %s186 = smul.addr %s185, 24
      %s187 = smul.addr %s186, 4
      %s188 = scalar_lea.vmem %s3, %s187
      %p189 = pneg %p131
      %p190 = pneg %p128
      %p191 = scmp.lt.s32.totalorder %s16, 1
      %s192 = scalar_select %p191, %s16, 1
      %s193 = smul.addr %s192, 2
      %s194 = scalar_lea.vmem %s4, %s193
      %p195 = scmp.lt.s32.totalorder %s16, 1
      %s196 = scalar_select %p195, %s16, 1
      %s197 = smul.addr %s196, 64
      %s198 = smul.addr %s197, 4
      %s199 = scalar_lea.vmem %s0, %s198
      %p200 = scmp.lt.s32.totalorder %s16, 1
      %s201 = scalar_select %p200, %s16, 1
      %s202 = smul.addr %s201, 24
      %s203 = smul.addr %s202, 4
      %s204 = scalar_lea.vmem %s3, %s203
      %p205 = scmp.lt.s32.totalorder %s16, 1
      %s206 = scalar_select %p205, %s16, 1
      %s207 = smul.addr %s206, 2
      %s208 = scalar_lea.vmem %s4, %s207
      %v210 = vld [vmem:[%s199] sm:$0xff]
      %v211 = vld [vmem:[%s199 + $0x8] sm:$0xff]
      %v212 = vld [vmem:[%s199 + $0x10] sm:$0xff]
      %v213 = vld [vmem:[%s199 + $0x18] sm:$0xff]
      %v214 = vld [vmem:[%s199 + $0x20] sm:$0xff]
      %v215 = vld [vmem:[%s199 + $0x28] sm:$0xff]
      %v216 = vld [vmem:[%s199 + $0x30] sm:$0xff]
      %v217 = vld [vmem:[%s199 + $0x38] sm:$0xff]
      %v218 = vld [vmem:[%s199 + $0x40] sm:$0xff]
      %v219 = vld [vmem:[%s199 + $0x48] sm:$0xff]
      %v220 = vld [vmem:[%s199 + $0x50] sm:$0xff]
      %v221 = vld [vmem:[%s199 + $0x58] sm:$0xff]
      %v222 = vld [vmem:[%s199 + $0x60] sm:$0xff]
      %v223 = vld [vmem:[%s199 + $0x68] sm:$0xff]
      %v224 = vld [vmem:[%s199 + $0x70] sm:$0xff]
      %v225 = vld [vmem:[%s199 + $0x78] sm:$0xff]
      %v226 = vld [vmem:[%s199 + $0x80] sm:$0xff]
      %v227 = vld [vmem:[%s199 + $0x88] sm:$0xff]
      %v228 = vld [vmem:[%s199 + $0x90] sm:$0xff]
      %v229 = vld [vmem:[%s199 + $0x98] sm:$0xff]
      %v230 = vld [vmem:[%s199 + $0xa0] sm:$0xff]
      %v231 = vld [vmem:[%s199 + $0xa8] sm:$0xff]
      %v232 = vld [vmem:[%s199 + $0xb0] sm:$0xff]
      %v233 = vld [vmem:[%s199 + $0xb8] sm:$0xff]
      %v234 = vld [vmem:[%s1] sm:$0xf]
      %v235 = vld [vmem:[%s1 + $0x4] sm:$0xf]
      %v236 = vld [vmem:[%s1 + $0x8] sm:$0xf]
      %v237 = vld [vmem:[%s1 + $0xc] sm:$0xf]
      %v238 = vld [vmem:[%s1 + $0x10] sm:$0xf]
      %v239 = vld [vmem:[%s1 + $0x14] sm:$0xf]
      %v240 = vld [vmem:[%s1 + $0x18] sm:$0xf]
      %v241 = vld [vmem:[%s1 + $0x1c] sm:$0xf]
      %v242 = vld [vmem:[%s1 + $0x20] sm:$0xf]
      %v243 = vld [vmem:[%s1 + $0x24] sm:$0xf]
      %v244 = vld [vmem:[%s1 + $0x28] sm:$0xf]
      %v245 = vld [vmem:[%s1 + $0x2c] sm:$0xf]
      %v246 = vld [vmem:[%s1 + $0x30] sm:$0xf]
      %v247 = vld [vmem:[%s1 + $0x34] sm:$0xf]
      %v248 = vld [vmem:[%s1 + $0x38] sm:$0xf]
      %v249 = vld [vmem:[%s1 + $0x3c] sm:$0xf]
      %v250 = vld [vmem:[%s1 + $0x40] sm:$0xf]
      %v251 = vld [vmem:[%s1 + $0x44] sm:$0xf]
      %v252 = vld [vmem:[%s1 + $0x48] sm:$0xf]
      %v253 = vld [vmem:[%s1 + $0x4c] sm:$0xf]
      %v254 = vld [vmem:[%s199 + $0xc0] sm:$0xff]
      %v255 = vld [vmem:[%s199 + $0xc8] sm:$0xff]
      %v256 = vld [vmem:[%s1 + $0x50] sm:$0xf]
      %v257 = vld [vmem:[%s1 + $0x54] sm:$0xf]
      %v258 = vld [vmem:[%s1 + $0x58] sm:$0xf]
      %v259 = vld [vmem:[%s1 + $0x5c] sm:$0xf]
      %v260 = vld [vmem:[%s1 + $0x60] sm:$0xf]
      %v261 = vld [vmem:[%s1 + $0x64] sm:$0xf]
      %v262 = vld [vmem:[%s1 + $0x68] sm:$0xf]
      %v263 = vld [vmem:[%s1 + $0x6c] sm:$0xf]
      %v264 = vld [vmem:[%s1 + $0x70] sm:$0xf]
      %v265 = vld [vmem:[%s1 + $0x74] sm:$0xf]
      %v266 = vld [vmem:[%s1 + $0x78] sm:$0xf]
      %v267 = vld [vmem:[%s1 + $0x7c] sm:$0xf]
      %v268 = vld [vmem:[%s1 + $0x80] sm:$0xf]
      %v269 = vld [vmem:[%s1 + $0x84] sm:$0xf]
      %v270 = vld [vmem:[%s1 + $0x88] sm:$0xf]
      %v271 = vld [vmem:[%s1 + $0x8c] sm:$0xf]
      %v272 = vld [vmem:[%s1 + $0x90] sm:$0xf]
      %v273 = vld [vmem:[%s1 + $0x94] sm:$0xf]
      %v274 = vld [vmem:[%s1 + $0x98] sm:$0xf]
      %v275 = vld [vmem:[%s1 + $0x9c] sm:$0xf]
      %v300 = vunpack.c.l.b16 %v212
      %v301 = vunpack.c.h.b16 %v212
      %v302 = vunpack.c.l.b16 %v213
      %v303 = vunpack.c.h.b16 %v213
      %v304 = vunpack.c.l.b16 %v214
      %v305 = vunpack.c.h.b16 %v214
      %v306 = vunpack.c.l.b16 %v215
      %v307 = vunpack.c.h.b16 %v215
      %v308 = vunpack.c.l.b16 %v216
      %v309 = vunpack.c.h.b16 %v216
      %v310 = vunpack.c.l.b16 %v217
      %v311 = vunpack.c.h.b16 %v217
      %v312 = vunpack.c.l.b16 %v218
      %v313 = vunpack.c.h.b16 %v218
      %v314 = vunpack.c.l.b16 %v219
      %v315 = vunpack.c.h.b16 %v219
      %v316 = vunpack.c.l.b16 %v220
      %v317 = vunpack.c.h.b16 %v220
      %v318 = vunpack.c.l.b16 %v221
      %v319 = vunpack.c.h.b16 %v221
      %v320 = vunpack.c.l.b16 %v222
      %v321 = vunpack.c.h.b16 %v222
      %v322 = vunpack.c.l.b16 %v223
      %v323 = vunpack.c.h.b16 %v223
      %v324 = vunpack.c.l.b16 %v224
      %v325 = vunpack.c.h.b16 %v224
      %v326 = vunpack.c.l.b16 %v225
      %v327 = vunpack.c.h.b16 %v225
      %v328 = vunpack.c.l.b16 %v226
      %v329 = vunpack.c.h.b16 %v226
      %v330 = vunpack.c.l.b16 %v227
      %v331 = vunpack.c.h.b16 %v227
      %v332 = vunpack.c.l.b16 %v228
      %v333 = vunpack.c.h.b16 %v228
      %v334 = vunpack.c.l.b16 %v229
      %v335 = vunpack.c.h.b16 %v229
      %v336 = vunpack.c.l.b16 %v230
      %v337 = vunpack.c.h.b16 %v230
      %v338 = vunpack.c.l.b16 %v231
      %v339 = vunpack.c.h.b16 %v231
      %v340 = vunpack.c.l.b16 %v232
      %v341 = vunpack.c.h.b16 %v232
      %v342 = vunpack.c.l.b16 %v233
      %v343 = vunpack.c.h.b16 %v233
      %v344 = vunpack.c.l.b16 %v254
      %v345 = vunpack.c.h.b16 %v254
      %v346 = vunpack.c.l.b16 %v255
      %v347 = vunpack.c.h.b16 %v255
      %v348 = vpack.c.b16 %v302, %v300
      %v349 = vpack.c.b16 %v303, %v301
      %v350 = vpack.c.b16 %v306, %v304
      %v351 = vpack.c.b16 %v307, %v305
      %v352 = vpack.c.b16 %v310, %v308
      %v353 = vpack.c.b16 %v311, %v309
      %v354 = vpack.c.b16 %v314, %v312
      %v355 = vpack.c.b16 %v315, %v313
      %v356 = vpack.c.b16 %v318, %v316
      %v357 = vpack.c.b16 %v319, %v317
      %v358 = vpack.c.b16 %v322, %v320
      %v359 = vpack.c.b16 %v323, %v321
      %v360 = vpack.c.b16 %v326, %v324
      %v361 = vpack.c.b16 %v327, %v325
      %v362 = vpack.c.b16 %v330, %v328
      %v363 = vpack.c.b16 %v331, %v329
      %v364 = vpack.c.b16 %v334, %v332
      %v365 = vpack.c.b16 %v335, %v333
      %v366 = vpack.c.b16 %v338, %v336
      %v367 = vpack.c.b16 %v339, %v337
      %v368 = vpack.c.b16 %v342, %v340
      %v369 = vpack.c.b16 %v343, %v341
      %v370 = vpack.c.b16 %v346, %v344
      %v371 = vpack.c.b16 %v347, %v345
      %v404 = vunpack.c.l.b16 %v256
      %v405 = vunpack.c.l.b16 %v257
      %v406 = vunpack.c.l.b16 %v258
      %v407 = vunpack.c.l.b16 %v259
      %v408 = vunpack.c.l.b16 %v260
      %v409 = vunpack.c.l.b16 %v261
      %v410 = vunpack.c.l.b16 %v262
      %v411 = vunpack.c.l.b16 %v263
      %v412 = vunpack.c.l.b16 %v264
      %v413 = vunpack.c.l.b16 %v265
      %v414 = vunpack.c.l.b16 %v266
      %v415 = vunpack.c.l.b16 %v267
      %v416 = vunpack.c.l.b16 %v268
      %v417 = vunpack.c.l.b16 %v269
      %v418 = vunpack.c.l.b16 %v270
      %v419 = vunpack.c.l.b16 %v271
      %v420 = vunpack.c.l.b16 %v272
      %v421 = vunpack.c.l.b16 %v273
      %v422 = vunpack.c.l.b16 %v274
      %v423 = vunpack.c.l.b16 %v275
      %v424 = vpack.c.b16 %v405, %v404
      %v425 = vpack.c.b16 %v407, %v406
      %v426 = vpack.c.b16 %v409, %v408
      %v427 = vpack.c.b16 %v411, %v410
      %v428 = vpack.c.b16 %v413, %v412
      %v429 = vpack.c.b16 %v415, %v414
      %v430 = vpack.c.b16 %v417, %v416
      %v431 = vpack.c.b16 %v419, %v418
      %v432 = vpack.c.b16 %v421, %v420
      %v433 = vpack.c.b16 %v423, %v422
      %vm444 = vcmask 261120
      %v446 = vsel %vm444, %v349, 0
      %v449 = vsel %vm444, %v351, 0
      %v452 = vsel %vm444, %v353, 0
      %v455 = vsel %vm444, %v355, 0
      %v458 = vsel %vm444, %v357, 0
      %v461 = vsel %vm444, %v359, 0
      %v464 = vsel %vm444, %v361, 0
      %v467 = vsel %vm444, %v363, 0
      %v470 = vsel %vm444, %v365, 0
      %v473 = vsel %vm444, %v367, 0
      %v476 = vsel %vm444, %v369, 0
      %v479 = vsel %vm444, %v371, 0
      %481 = vmatpush.bf16.msra.mxu0 %v431
      %482 = vmatpush.bf16.msra.mxu0 %v430
      %483 = vmatpush.bf16.msra.mxu0 %v429
      %484 = vmatpush.bf16.msra.mxu0 %v428
      %485 = vmatpush.bf16.msra.mxu0 %v427
      %486 = vmatpush.bf16.msra.mxu0 %v426
      %487 = vmatpush.bf16.msra.mxu0 %v425
      %488 = vmatpush.bf16.msra.mxu0 %v424
      %489 = vmatmul.bf16.gmra.mxu0 %v348
      %v490 = vpop.f32.mrf.mxu0
      %v491 = vadd.f32 0.0, %v490
      %v492 = vpop.f32.mrf.mxu0
      %v493 = vadd.f32 0.0, %v492
      %494 = vmatmul.bf16.gmra.mxu0 %v350
      %v495 = vpop.f32.mrf.mxu0
      %v496 = vadd.f32 0.0, %v495
      %v497 = vpop.f32.mrf.mxu0
      %v498 = vadd.f32 0.0, %v497
      %499 = vmatmul.bf16.gmra.mxu0 %v352
      %v500 = vpop.f32.mrf.mxu0
      %v501 = vadd.f32 0.0, %v500
      %v502 = vpop.f32.mrf.mxu0
      %v503 = vadd.f32 0.0, %v502
      %504 = vmatmul.bf16.gmra.mxu0 %v354
      %v505 = vpop.f32.mrf.mxu0
      %v506 = vadd.f32 0.0, %v505
      %v507 = vpop.f32.mrf.mxu0
      %v508 = vadd.f32 0.0, %v507
      %509 = vmatmul.bf16.gmra.mxu0 %v356
      %v510 = vpop.f32.mrf.mxu0
      %v511 = vadd.f32 0.0, %v510
      %v512 = vpop.f32.mrf.mxu0
      %v513 = vadd.f32 0.0, %v512
      %514 = vmatmul.bf16.gmra.mxu0 %v358
      %v515 = vpop.f32.mrf.mxu0
      %v516 = vadd.f32 0.0, %v515
      %v517 = vpop.f32.mrf.mxu0
      %v518 = vadd.f32 0.0, %v517
      %519 = vmatmul.bf16.gmra.mxu0 %v360
      %v520 = vpop.f32.mrf.mxu0
      %v521 = vadd.f32 0.0, %v520
      %v522 = vpop.f32.mrf.mxu0
      %v523 = vadd.f32 0.0, %v522
      %524 = vmatmul.bf16.gmra.mxu0 %v362
      %v525 = vpop.f32.mrf.mxu0
      %v526 = vadd.f32 0.0, %v525
      %v527 = vpop.f32.mrf.mxu0
      %v528 = vadd.f32 0.0, %v527
      %529 = vmatmul.bf16.gmra.mxu0 %v364
      %v530 = vpop.f32.mrf.mxu0
      %v531 = vadd.f32 0.0, %v530
      %v532 = vpop.f32.mrf.mxu0
      %v533 = vadd.f32 0.0, %v532
      %534 = vmatmul.bf16.gmra.mxu0 %v366
      %v535 = vpop.f32.mrf.mxu0
      %v536 = vadd.f32 0.0, %v535
      %v537 = vpop.f32.mrf.mxu0
      %v538 = vadd.f32 0.0, %v537
      %539 = vmatmul.bf16.gmra.mxu0 %v368
      %v540 = vpop.f32.mrf.mxu0
      %v541 = vadd.f32 0.0, %v540
      %v542 = vpop.f32.mrf.mxu0
      %v543 = vadd.f32 0.0, %v542
      %544 = vmatmul.bf16.gmra.mxu0 %v370
      %v545 = vpop.f32.mrf.mxu0
      %v546 = vadd.f32 0.0, %v545
      %v547 = vpop.f32.mrf.mxu0
      %v548 = vadd.f32 0.0, %v547
      %549 = vdwg.mxu0
      %550 = vmatpush.bf16.msra.mxu0 0
      %551 = vmatpush.bf16.msra.mxu0 0
      %552 = vmatpush.bf16.msra.mxu0 0
      %553 = vmatpush.bf16.msra.mxu0 0
      %554 = vmatpush.bf16.msra.mxu0 0
      %555 = vmatpush.bf16.msra.mxu0 0
      %556 = vmatpush.bf16.msra.mxu0 %v433
      %557 = vmatpush.bf16.msra.mxu0 %v432
      %558 = vmatmul.bf16.gmra.mxu0 %v446
      %v559 = vpop.f32.mrf.mxu0
      %v560 = vadd.f32 %v491, %v559
      %v561 = vpop.f32.mrf.mxu0
      %v562 = vadd.f32 %v493, %v561
      %563 = vmatmul.bf16.gmra.mxu0 %v449
      %v564 = vpop.f32.mrf.mxu0
      %v565 = vadd.f32 %v496, %v564
      %v566 = vpop.f32.mrf.mxu0
      %v567 = vadd.f32 %v498, %v566
      %568 = vmatmul.bf16.gmra.mxu0 %v452
      %v569 = vpop.f32.mrf.mxu0
      %v570 = vadd.f32 %v501, %v569
      %v571 = vpop.f32.mrf.mxu0
      %v572 = vadd.f32 %v503, %v571
      %573 = vmatmul.bf16.gmra.mxu0 %v455
      %v574 = vpop.f32.mrf.mxu0
      %v575 = vadd.f32 %v506, %v574
      %v576 = vpop.f32.mrf.mxu0
      %v577 = vadd.f32 %v508, %v576
      %578 = vmatmul.bf16.gmra.mxu0 %v458
      %v579 = vpop.f32.mrf.mxu0
      %v580 = vadd.f32 %v511, %v579
      %v581 = vpop.f32.mrf.mxu0
      %v582 = vadd.f32 %v513, %v581
      %583 = vmatmul.bf16.gmra.mxu0 %v461
      %v584 = vpop.f32.mrf.mxu0
      %v585 = vadd.f32 %v516, %v584
      %v586 = vpop.f32.mrf.mxu0
      %v587 = vadd.f32 %v518, %v586
      %588 = vmatmul.bf16.gmra.mxu0 %v464
      %v589 = vpop.f32.mrf.mxu0
      %v590 = vadd.f32 %v521, %v589
      %v591 = vpop.f32.mrf.mxu0
      %v592 = vadd.f32 %v523, %v591
      %593 = vmatmul.bf16.gmra.mxu0 %v467
      %v594 = vpop.f32.mrf.mxu0
      %v595 = vadd.f32 %v526, %v594
      %v596 = vpop.f32.mrf.mxu0
      %v597 = vadd.f32 %v528, %v596
      %598 = vmatmul.bf16.gmra.mxu0 %v470
      %v599 = vpop.f32.mrf.mxu0
      %v600 = vadd.f32 %v531, %v599
      %v601 = vpop.f32.mrf.mxu0
      %v602 = vadd.f32 %v533, %v601
      %603 = vmatmul.bf16.gmra.mxu0 %v473
      %v604 = vpop.f32.mrf.mxu0
      %v605 = vadd.f32 %v536, %v604
      %v606 = vpop.f32.mrf.mxu0
      %v607 = vadd.f32 %v538, %v606
      %608 = vmatmul.bf16.gmra.mxu0 %v476
      %v609 = vpop.f32.mrf.mxu0
      %v610 = vadd.f32 %v541, %v609
      %v611 = vpop.f32.mrf.mxu0
      %v612 = vadd.f32 %v543, %v611
      %613 = vmatmul.bf16.gmra.mxu0 %v479
      %v614 = vpop.f32.mrf.mxu0
      %v615 = vadd.f32 %v546, %v614
      %v616 = vpop.f32.mrf.mxu0
      %v617 = vadd.f32 %v548, %v616
      %618 = vdwg.mxu0
      %v621 = vunpack.c.l.b16 %v210
      %v622 = vunpack.c.h.b16 %v210
      %v623 = vunpack.c.l.b16 %v211
      %v624 = vunpack.c.h.b16 %v211
      %v625 = vpack.c.b16 %v623, %v621
      %v626 = vpack.c.b16 %v624, %v622
      %v648 = vunpack.c.l.b16 %v234
      %v649 = vunpack.c.l.b16 %v235
      %v650 = vunpack.c.l.b16 %v236
      %v651 = vunpack.c.l.b16 %v237
      %v652 = vunpack.c.l.b16 %v238
      %v653 = vunpack.c.l.b16 %v239
      %v654 = vunpack.c.l.b16 %v240
      %v655 = vunpack.c.l.b16 %v241
      %v656 = vunpack.c.l.b16 %v242
      %v657 = vunpack.c.l.b16 %v243
      %v658 = vunpack.c.l.b16 %v244
      %v659 = vunpack.c.l.b16 %v245
      %v660 = vunpack.c.l.b16 %v246
      %v661 = vunpack.c.l.b16 %v247
      %v662 = vunpack.c.l.b16 %v248
      %v663 = vunpack.c.l.b16 %v249
      %v664 = vunpack.c.l.b16 %v250
      %v665 = vunpack.c.l.b16 %v251
      %v666 = vunpack.c.l.b16 %v252
      %v667 = vunpack.c.l.b16 %v253
      %v668 = vpack.c.b16 %v649, %v648
      %v669 = vpack.c.b16 %v651, %v650
      %v670 = vpack.c.b16 %v653, %v652
      %v671 = vpack.c.b16 %v655, %v654
      %v672 = vpack.c.b16 %v657, %v656
      %v673 = vpack.c.b16 %v659, %v658
      %v674 = vpack.c.b16 %v661, %v660
      %v675 = vpack.c.b16 %v663, %v662
      %v676 = vpack.c.b16 %v665, %v664
      %v677 = vpack.c.b16 %v667, %v666
      %v689 = vsel %vm444, %v626, 0
      %691 = vmatpush.bf16.msra.mxu0 %v675
      %692 = vmatpush.bf16.msra.mxu0 %v674
      %693 = vmatpush.bf16.msra.mxu0 %v673
      %694 = vmatpush.bf16.msra.mxu0 %v672
      %695 = vmatpush.bf16.msra.mxu0 %v671
      %696 = vmatpush.bf16.msra.mxu0 %v670
      %697 = vmatpush.bf16.msra.mxu0 %v669
      %698 = vmatpush.bf16.msra.mxu0 %v668
      %699 = vmatmul.bf16.gmra.mxu0 %v625
      %v700 = vpop.f32.mrf.mxu0
      %v701 = vadd.f32 %v560, %v700
      %v702 = vpop.f32.mrf.mxu0
      %v703 = vadd.f32 %v562, %v702
      %704 = vmatmul.bf16.gmra.mxu0 %v348
      %v705 = vpop.f32.mrf.mxu0
      %v706 = vadd.f32 %v565, %v705
      %v707 = vpop.f32.mrf.mxu0
      %v708 = vadd.f32 %v567, %v707
      %709 = vmatmul.bf16.gmra.mxu0 %v350
      %v710 = vpop.f32.mrf.mxu0
      %v711 = vadd.f32 %v570, %v710
      %v712 = vpop.f32.mrf.mxu0
      %v713 = vadd.f32 %v572, %v712
      %714 = vmatmul.bf16.gmra.mxu0 %v352
      %v715 = vpop.f32.mrf.mxu0
      %v716 = vadd.f32 %v575, %v715
      %v717 = vpop.f32.mrf.mxu0
      %v718 = vadd.f32 %v577, %v717
      %719 = vmatmul.bf16.gmra.mxu0 %v354
      %v720 = vpop.f32.mrf.mxu0
      %v721 = vadd.f32 %v580, %v720
      %v722 = vpop.f32.mrf.mxu0
      %v723 = vadd.f32 %v582, %v722
      %724 = vmatmul.bf16.gmra.mxu0 %v356
      %v725 = vpop.f32.mrf.mxu0
      %v726 = vadd.f32 %v585, %v725
      %v727 = vpop.f32.mrf.mxu0
      %v728 = vadd.f32 %v587, %v727
      %729 = vmatmul.bf16.gmra.mxu0 %v358
      %v730 = vpop.f32.mrf.mxu0
      %v731 = vadd.f32 %v590, %v730
      %v732 = vpop.f32.mrf.mxu0
      %v733 = vadd.f32 %v592, %v732
      %734 = vmatmul.bf16.gmra.mxu0 %v360
      %v735 = vpop.f32.mrf.mxu0
      %v736 = vadd.f32 %v595, %v735
      %v737 = vpop.f32.mrf.mxu0
      %v738 = vadd.f32 %v597, %v737
      %739 = vmatmul.bf16.gmra.mxu0 %v362
      %v740 = vpop.f32.mrf.mxu0
      %v741 = vadd.f32 %v600, %v740
      %v742 = vpop.f32.mrf.mxu0
      %v743 = vadd.f32 %v602, %v742
      %744 = vmatmul.bf16.gmra.mxu0 %v364
      %v745 = vpop.f32.mrf.mxu0
      %v746 = vadd.f32 %v605, %v745
      %v747 = vpop.f32.mrf.mxu0
      %v748 = vadd.f32 %v607, %v747
      %749 = vmatmul.bf16.gmra.mxu0 %v366
      %v750 = vpop.f32.mrf.mxu0
      %v751 = vadd.f32 %v610, %v750
      %v752 = vpop.f32.mrf.mxu0
      %v753 = vadd.f32 %v612, %v752
      %754 = vmatmul.bf16.gmra.mxu0 %v368
      %v755 = vpop.f32.mrf.mxu0
      %v756 = vadd.f32 %v615, %v755
      %v757 = vpop.f32.mrf.mxu0
      %v758 = vadd.f32 %v617, %v757
      %759 = vdwg.mxu0
      %760 = vmatpush.bf16.msra.mxu0 0
      %761 = vmatpush.bf16.msra.mxu0 0
      %762 = vmatpush.bf16.msra.mxu0 0
      %763 = vmatpush.bf16.msra.mxu0 0
      %764 = vmatpush.bf16.msra.mxu0 0
      %765 = vmatpush.bf16.msra.mxu0 0
      %766 = vmatpush.bf16.msra.mxu0 %v677
      %767 = vmatpush.bf16.msra.mxu0 %v676
      %768 = vmatmul.bf16.gmra.mxu0 %v689
      %v769 = vpop.f32.mrf.mxu0
      %v770 = vadd.f32 %v701, %v769
      %v771 = vpop.f32.mrf.mxu0
      %v772 = vadd.f32 %v703, %v771
      %773 = vmatmul.bf16.gmra.mxu0 %v446
      %v774 = vpop.f32.mrf.mxu0
      %v775 = vadd.f32 %v706, %v774
      %v776 = vpop.f32.mrf.mxu0
      %v777 = vadd.f32 %v708, %v776
      %778 = vmatmul.bf16.gmra.mxu0 %v449
      %v779 = vpop.f32.mrf.mxu0
      %v780 = vadd.f32 %v711, %v779
      %v781 = vpop.f32.mrf.mxu0
      %v782 = vadd.f32 %v713, %v781
      %783 = vmatmul.bf16.gmra.mxu0 %v452
      %v784 = vpop.f32.mrf.mxu0
      %v785 = vadd.f32 %v716, %v784
      %v786 = vpop.f32.mrf.mxu0
      %v787 = vadd.f32 %v718, %v786
      %788 = vmatmul.bf16.gmra.mxu0 %v455
      %v789 = vpop.f32.mrf.mxu0
      %v790 = vadd.f32 %v721, %v789
      %v791 = vpop.f32.mrf.mxu0
      %v792 = vadd.f32 %v723, %v791
      %793 = vmatmul.bf16.gmra.mxu0 %v458
      %v794 = vpop.f32.mrf.mxu0
      %v795 = vadd.f32 %v726, %v794
      %v796 = vpop.f32.mrf.mxu0
      %v797 = vadd.f32 %v728, %v796
      %798 = vmatmul.bf16.gmra.mxu0 %v461
      %v799 = vpop.f32.mrf.mxu0
      %v800 = vadd.f32 %v731, %v799
      %v801 = vpop.f32.mrf.mxu0
      %v802 = vadd.f32 %v733, %v801
      %803 = vmatmul.bf16.gmra.mxu0 %v464
      %v804 = vpop.f32.mrf.mxu0
      %v805 = vadd.f32 %v736, %v804
      %v806 = vpop.f32.mrf.mxu0
      %v807 = vadd.f32 %v738, %v806
      %808 = vmatmul.bf16.gmra.mxu0 %v467
      %v809 = vpop.f32.mrf.mxu0
      %v810 = vadd.f32 %v741, %v809
      %v811 = vpop.f32.mrf.mxu0
      %v812 = vadd.f32 %v743, %v811
      %813 = vmatmul.bf16.gmra.mxu0 %v470
      %v814 = vpop.f32.mrf.mxu0
      %v815 = vadd.f32 %v746, %v814
      %v816 = vpop.f32.mrf.mxu0
      %v817 = vadd.f32 %v748, %v816
      %818 = vmatmul.bf16.gmra.mxu0 %v473
      %v819 = vpop.f32.mrf.mxu0
      %v820 = vadd.f32 %v751, %v819
      %v821 = vpop.f32.mrf.mxu0
      %v822 = vadd.f32 %v753, %v821
      %823 = vmatmul.bf16.gmra.mxu0 %v476
      %v824 = vpop.f32.mrf.mxu0
      %v825 = vadd.f32 %v756, %v824
      %v826 = vpop.f32.mrf.mxu0
      %v827 = vadd.f32 %v758, %v826
      %828 = vdwg.mxu0
      %v829 = vld [vmem:[%s199 + $0x20] sm:$0xff]
      %v830 = vld [vmem:[%s199 + $0x28] sm:$0xff]
      %v831 = vld [vmem:[%s199 + $0x30] sm:$0xff]
      %v832 = vld [vmem:[%s199 + $0x38] sm:$0xff]
      %v833 = vld [vmem:[%s199 + $0x40] sm:$0xff]
      %v834 = vld [vmem:[%s199 + $0x48] sm:$0xff]
      %v835 = vld [vmem:[%s199 + $0x50] sm:$0xff]
      %v836 = vld [vmem:[%s199 + $0x58] sm:$0xff]
      %v837 = vld [vmem:[%s199 + $0x60] sm:$0xff]
      %v838 = vld [vmem:[%s199 + $0x68] sm:$0xff]
      %v839 = vld [vmem:[%s199 + $0x70] sm:$0xff]
      %v840 = vld [vmem:[%s199 + $0x78] sm:$0xff]
      %v841 = vld [vmem:[%s199 + $0x80] sm:$0xff]
      %v842 = vld [vmem:[%s199 + $0x88] sm:$0xff]
      %v843 = vld [vmem:[%s199 + $0x90] sm:$0xff]
      %v844 = vld [vmem:[%s199 + $0x98] sm:$0xff]
      %v845 = vld [vmem:[%s199 + $0xa0] sm:$0xff]
      %v846 = vld [vmem:[%s199 + $0xa8] sm:$0xff]
      %v847 = vld [vmem:[%s199 + $0xb0] sm:$0xff]
      %v848 = vld [vmem:[%s199 + $0xb8] sm:$0xff]
      %v849 = vld [vmem:[%s199 + $0xc0] sm:$0xff]
      %v850 = vld [vmem:[%s199 + $0xc8] sm:$0xff]
      %v851 = vld [vmem:[%s199 + $0xd0] sm:$0xff]
      %v852 = vld [vmem:[%s199 + $0xd8] sm:$0xff]
      %v853 = vld [vmem:[%s1 + $0xa0] sm:$0xf]
      %v854 = vld [vmem:[%s1 + $0xa4] sm:$0xf]
      %v855 = vld [vmem:[%s1 + $0xa8] sm:$0xf]
      %v856 = vld [vmem:[%s1 + $0xac] sm:$0xf]
      %v857 = vld [vmem:[%s1 + $0xb0] sm:$0xf]
      %v858 = vld [vmem:[%s1 + $0xb4] sm:$0xf]
      %v859 = vld [vmem:[%s1 + $0xb8] sm:$0xf]
      %v860 = vld [vmem:[%s1 + $0xbc] sm:$0xf]
      %v861 = vld [vmem:[%s1 + $0xc0] sm:$0xf]
      %v862 = vld [vmem:[%s1 + $0xc4] sm:$0xf]
      %v863 = vld [vmem:[%s1 + $0xc8] sm:$0xf]
      %v864 = vld [vmem:[%s1 + $0xcc] sm:$0xf]
      %v865 = vld [vmem:[%s1 + $0xd0] sm:$0xf]
      %v866 = vld [vmem:[%s1 + $0xd4] sm:$0xf]
      %v867 = vld [vmem:[%s1 + $0xd8] sm:$0xf]
      %v868 = vld [vmem:[%s1 + $0xdc] sm:$0xf]
      %v869 = vld [vmem:[%s1 + $0xe0] sm:$0xf]
      %v870 = vld [vmem:[%s1 + $0xe4] sm:$0xf]
      %v871 = vld [vmem:[%s1 + $0xe8] sm:$0xf]
      %v872 = vld [vmem:[%s1 + $0xec] sm:$0xf]
      %v897 = vunpack.c.l.b16 %v829
      %v898 = vunpack.c.h.b16 %v829
      %v899 = vunpack.c.l.b16 %v830
      %v900 = vunpack.c.h.b16 %v830
      %v901 = vunpack.c.l.b16 %v831
      %v902 = vunpack.c.h.b16 %v831
      %v903 = vunpack.c.l.b16 %v832
      %v904 = vunpack.c.h.b16 %v832
      %v905 = vunpack.c.l.b16 %v833
      %v906 = vunpack.c.h.b16 %v833
      %v907 = vunpack.c.l.b16 %v834
      %v908 = vunpack.c.h.b16 %v834
      %v909 = vunpack.c.l.b16 %v835
      %v910 = vunpack.c.h.b16 %v835
      %v911 = vunpack.c.l.b16 %v836
      %v912 = vunpack.c.h.b16 %v836
      %v913 = vunpack.c.l.b16 %v837
      %v914 = vunpack.c.h.b16 %v837
      %v915 = vunpack.c.l.b16 %v838
      %v916 = vunpack.c.h.b16 %v838
      %v917 = vunpack.c.l.b16 %v839
      %v918 = vunpack.c.h.b16 %v839
      %v919 = vunpack.c.l.b16 %v840
      %v920 = vunpack.c.h.b16 %v840
      %v921 = vunpack.c.l.b16 %v841
      %v922 = vunpack.c.h.b16 %v841
      %v923 = vunpack.c.l.b16 %v842
      %v924 = vunpack.c.h.b16 %v842
      %v925 = vunpack.c.l.b16 %v843
      %v926 = vunpack.c.h.b16 %v843
      %v927 = vunpack.c.l.b16 %v844
      %v928 = vunpack.c.h.b16 %v844
      %v929 = vunpack.c.l.b16 %v845
      %v930 = vunpack.c.h.b16 %v845
      %v931 = vunpack.c.l.b16 %v846
      %v932 = vunpack.c.h.b16 %v846
      %v933 = vunpack.c.l.b16 %v847
      %v934 = vunpack.c.h.b16 %v847
      %v935 = vunpack.c.l.b16 %v848
      %v936 = vunpack.c.h.b16 %v848
      %v937 = vunpack.c.l.b16 %v849
      %v938 = vunpack.c.h.b16 %v849
      %v939 = vunpack.c.l.b16 %v850
      %v940 = vunpack.c.h.b16 %v850
      %v941 = vunpack.c.l.b16 %v851
      %v942 = vunpack.c.h.b16 %v851
      %v943 = vunpack.c.l.b16 %v852
      %v944 = vunpack.c.h.b16 %v852
      %v945 = vpack.c.b16 %v899, %v897
      %v946 = vpack.c.b16 %v900, %v898
      %v947 = vpack.c.b16 %v903, %v901
      %v948 = vpack.c.b16 %v904, %v902
      %v949 = vpack.c.b16 %v907, %v905
      %v950 = vpack.c.b16 %v908, %v906
      %v951 = vpack.c.b16 %v911, %v909
      %v952 = vpack.c.b16 %v912, %v910
      %v953 = vpack.c.b16 %v915, %v913
      %v954 = vpack.c.b16 %v916, %v914
      %v955 = vpack.c.b16 %v919, %v917
      %v956 = vpack.c.b16 %v920, %v918
      %v957 = vpack.c.b16 %v923, %v921
      %v958 = vpack.c.b16 %v924, %v922
      %v959 = vpack.c.b16 %v927, %v925
      %v960 = vpack.c.b16 %v928, %v926
      %v961 = vpack.c.b16 %v931, %v929
      %v962 = vpack.c.b16 %v932, %v930
      %v963 = vpack.c.b16 %v935, %v933
      %v964 = vpack.c.b16 %v936, %v934
      %v965 = vpack.c.b16 %v939, %v937
      %v966 = vpack.c.b16 %v940, %v938
      %v967 = vpack.c.b16 %v943, %v941
      %v968 = vpack.c.b16 %v944, %v942
      %v1001 = vunpack.c.l.b16 %v853
      %v1002 = vunpack.c.l.b16 %v854
      %v1003 = vunpack.c.l.b16 %v855
      %v1004 = vunpack.c.l.b16 %v856
      %v1005 = vunpack.c.l.b16 %v857
      %v1006 = vunpack.c.l.b16 %v858
      %v1007 = vunpack.c.l.b16 %v859
      %v1008 = vunpack.c.l.b16 %v860
      %v1009 = vunpack.c.l.b16 %v861
      %v1010 = vunpack.c.l.b16 %v862
      %v1011 = vunpack.c.l.b16 %v863
      %v1012 = vunpack.c.l.b16 %v864
      %v1013 = vunpack.c.l.b16 %v865
      %v1014 = vunpack.c.l.b16 %v866
      %v1015 = vunpack.c.l.b16 %v867
      %v1016 = vunpack.c.l.b16 %v868
      %v1017 = vunpack.c.l.b16 %v869
      %v1018 = vunpack.c.l.b16 %v870
      %v1019 = vunpack.c.l.b16 %v871
      %v1020 = vunpack.c.l.b16 %v872
      %v1021 = vpack.c.b16 %v1002, %v1001
      %v1022 = vpack.c.b16 %v1004, %v1003
      %v1023 = vpack.c.b16 %v1006, %v1005
      %v1024 = vpack.c.b16 %v1008, %v1007
      %v1025 = vpack.c.b16 %v1010, %v1009
      %v1026 = vpack.c.b16 %v1012, %v1011
      %v1027 = vpack.c.b16 %v1014, %v1013
      %v1028 = vpack.c.b16 %v1016, %v1015
      %v1029 = vpack.c.b16 %v1018, %v1017
      %v1030 = vpack.c.b16 %v1020, %v1019
      %v1042 = vsel %vm444, %v946, 0
      %v1045 = vsel %vm444, %v948, 0
      %v1048 = vsel %vm444, %v950, 0
      %v1051 = vsel %vm444, %v952, 0
      %v1054 = vsel %vm444, %v954, 0
      %v1057 = vsel %vm444, %v956, 0
      %v1060 = vsel %vm444, %v958, 0
      %v1063 = vsel %vm444, %v960, 0
      %v1066 = vsel %vm444, %v962, 0
      %v1069 = vsel %vm444, %v964, 0
      %v1072 = vsel %vm444, %v966, 0
      %v1075 = vsel %vm444, %v968, 0
      %1077 = vmatpush.bf16.msra.mxu0 %v1028
      %1078 = vmatpush.bf16.msra.mxu0 %v1027
      %1079 = vmatpush.bf16.msra.mxu0 %v1026
      %1080 = vmatpush.bf16.msra.mxu0 %v1025
      %1081 = vmatpush.bf16.msra.mxu0 %v1024
      %1082 = vmatpush.bf16.msra.mxu0 %v1023
      %1083 = vmatpush.bf16.msra.mxu0 %v1022
      %1084 = vmatpush.bf16.msra.mxu0 %v1021
      %1085 = vmatmul.bf16.gmra.mxu0 %v945
      %v1086 = vpop.f32.mrf.mxu0
      %v1087 = vadd.f32 0.0, %v1086
      %v1088 = vpop.f32.mrf.mxu0
      %v1089 = vadd.f32 0.0, %v1088
      %1090 = vmatmul.bf16.gmra.mxu0 %v947
      %v1091 = vpop.f32.mrf.mxu0
      %v1092 = vadd.f32 0.0, %v1091
      %v1093 = vpop.f32.mrf.mxu0
      %v1094 = vadd.f32 0.0, %v1093
      %1095 = vmatmul.bf16.gmra.mxu0 %v949
      %v1096 = vpop.f32.mrf.mxu0
      %v1097 = vadd.f32 0.0, %v1096
      %v1098 = vpop.f32.mrf.mxu0
      %v1099 = vadd.f32 0.0, %v1098
      %1100 = vmatmul.bf16.gmra.mxu0 %v951
      %v1101 = vpop.f32.mrf.mxu0
      %v1102 = vadd.f32 0.0, %v1101
      %v1103 = vpop.f32.mrf.mxu0
      %v1104 = vadd.f32 0.0, %v1103
      %1105 = vmatmul.bf16.gmra.mxu0 %v953
      %v1106 = vpop.f32.mrf.mxu0
      %v1107 = vadd.f32 0.0, %v1106
      %v1108 = vpop.f32.mrf.mxu0
      %v1109 = vadd.f32 0.0, %v1108
      %1110 = vmatmul.bf16.gmra.mxu0 %v955
      %v1111 = vpop.f32.mrf.mxu0
      %v1112 = vadd.f32 0.0, %v1111
      %v1113 = vpop.f32.mrf.mxu0
      %v1114 = vadd.f32 0.0, %v1113
      %1115 = vmatmul.bf16.gmra.mxu0 %v957
      %v1116 = vpop.f32.mrf.mxu0
      %v1117 = vadd.f32 0.0, %v1116
      %v1118 = vpop.f32.mrf.mxu0
      %v1119 = vadd.f32 0.0, %v1118
      %1120 = vmatmul.bf16.gmra.mxu0 %v959
      %v1121 = vpop.f32.mrf.mxu0
      %v1122 = vadd.f32 0.0, %v1121
      %v1123 = vpop.f32.mrf.mxu0
      %v1124 = vadd.f32 0.0, %v1123
      %1125 = vmatmul.bf16.gmra.mxu0 %v961
      %v1126 = vpop.f32.mrf.mxu0
      %v1127 = vadd.f32 0.0, %v1126
      %v1128 = vpop.f32.mrf.mxu0
      %v1129 = vadd.f32 0.0, %v1128
      %1130 = vmatmul.bf16.gmra.mxu0 %v963
      %v1131 = vpop.f32.mrf.mxu0
      %v1132 = vadd.f32 0.0, %v1131
      %v1133 = vpop.f32.mrf.mxu0
      %v1134 = vadd.f32 0.0, %v1133
      %1135 = vmatmul.bf16.gmra.mxu0 %v965
      %v1136 = vpop.f32.mrf.mxu0
      %v1137 = vadd.f32 0.0, %v1136
      %v1138 = vpop.f32.mrf.mxu0
      %v1139 = vadd.f32 0.0, %v1138
      %1140 = vmatmul.bf16.gmra.mxu0 %v967
      %v1141 = vpop.f32.mrf.mxu0
      %v1142 = vadd.f32 0.0, %v1141
      %v1143 = vpop.f32.mrf.mxu0
      %v1144 = vadd.f32 0.0, %v1143
      %1145 = vdwg.mxu0
      %1146 = vmatpush.bf16.msra.mxu0 0
      %1147 = vmatpush.bf16.msra.mxu0 0
      %1148 = vmatpush.bf16.msra.mxu0 0
      %1149 = vmatpush.bf16.msra.mxu0 0
      %1150 = vmatpush.bf16.msra.mxu0 0
      %1151 = vmatpush.bf16.msra.mxu0 0
      %1152 = vmatpush.bf16.msra.mxu0 %v1030
      %1153 = vmatpush.bf16.msra.mxu0 %v1029
      %1154 = vmatmul.bf16.gmra.mxu0 %v1042
      %v1155 = vpop.f32.mrf.mxu0
      %v1156 = vadd.f32 %v1087, %v1155
      %v1157 = vpop.f32.mrf.mxu0
      %v1158 = vadd.f32 %v1089, %v1157
      %1159 = vmatmul.bf16.gmra.mxu0 %v1045
      %v1160 = vpop.f32.mrf.mxu0
      %v1161 = vadd.f32 %v1092, %v1160
      %v1162 = vpop.f32.mrf.mxu0
      %v1163 = vadd.f32 %v1094, %v1162
      %1164 = vmatmul.bf16.gmra.mxu0 %v1048
      %v1165 = vpop.f32.mrf.mxu0
      %v1166 = vadd.f32 %v1097, %v1165
      %v1167 = vpop.f32.mrf.mxu0
      %v1168 = vadd.f32 %v1099, %v1167
      %1169 = vmatmul.bf16.gmra.mxu0 %v1051
      %v1170 = vpop.f32.mrf.mxu0
      %v1171 = vadd.f32 %v1102, %v1170
      %v1172 = vpop.f32.mrf.mxu0
      %v1173 = vadd.f32 %v1104, %v1172
      %1174 = vmatmul.bf16.gmra.mxu0 %v1054
      %v1175 = vpop.f32.mrf.mxu0
      %v1176 = vadd.f32 %v1107, %v1175
      %v1177 = vpop.f32.mrf.mxu0
      %v1178 = vadd.f32 %v1109, %v1177
      %1179 = vmatmul.bf16.gmra.mxu0 %v1057
      %v1180 = vpop.f32.mrf.mxu0
      %v1181 = vadd.f32 %v1112, %v1180
      %v1182 = vpop.f32.mrf.mxu0
      %v1183 = vadd.f32 %v1114, %v1182
      %1184 = vmatmul.bf16.gmra.mxu0 %v1060
      %v1185 = vpop.f32.mrf.mxu0
      %v1186 = vadd.f32 %v1117, %v1185
      %v1187 = vpop.f32.mrf.mxu0
      %v1188 = vadd.f32 %v1119, %v1187
      %1189 = vmatmul.bf16.gmra.mxu0 %v1063
      %v1190 = vpop.f32.mrf.mxu0
      %v1191 = vadd.f32 %v1122, %v1190
      %v1192 = vpop.f32.mrf.mxu0
      %v1193 = vadd.f32 %v1124, %v1192
      %1194 = vmatmul.bf16.gmra.mxu0 %v1066
      %v1195 = vpop.f32.mrf.mxu0
      %v1196 = vadd.f32 %v1127, %v1195
      %v1197 = vpop.f32.mrf.mxu0
      %v1198 = vadd.f32 %v1129, %v1197
      %1199 = vmatmul.bf16.gmra.mxu0 %v1069
      %v1200 = vpop.f32.mrf.mxu0
      %v1201 = vadd.f32 %v1132, %v1200
      %v1202 = vpop.f32.mrf.mxu0
      %v1203 = vadd.f32 %v1134, %v1202
      %1204 = vmatmul.bf16.gmra.mxu0 %v1072
      %v1205 = vpop.f32.mrf.mxu0
      %v1206 = vadd.f32 %v1137, %v1205
      %v1207 = vpop.f32.mrf.mxu0
      %v1208 = vadd.f32 %v1139, %v1207
      %1209 = vmatmul.bf16.gmra.mxu0 %v1075
      %v1210 = vpop.f32.mrf.mxu0
      %v1211 = vadd.f32 %v1142, %v1210
      %v1212 = vpop.f32.mrf.mxu0
      %v1213 = vadd.f32 %v1144, %v1212
      %1214 = vdwg.mxu0
      %v1215 = vadd.f32 %v770, %v1156
      %v1216 = vadd.f32 %v772, %v1158
      %v1217 = vadd.f32 %v775, %v1161
      %v1218 = vadd.f32 %v777, %v1163
      %v1219 = vadd.f32 %v780, %v1166
      %v1220 = vadd.f32 %v782, %v1168
      %v1221 = vadd.f32 %v785, %v1171
      %v1222 = vadd.f32 %v787, %v1173
      %v1223 = vadd.f32 %v790, %v1176
      %v1224 = vadd.f32 %v792, %v1178
      %v1225 = vadd.f32 %v795, %v1181
      %v1226 = vadd.f32 %v797, %v1183
      %v1227 = vadd.f32 %v800, %v1186
      %v1228 = vadd.f32 %v802, %v1188
      %v1229 = vadd.f32 %v805, %v1191
      %v1230 = vadd.f32 %v807, %v1193
      %v1231 = vadd.f32 %v810, %v1196
      %v1232 = vadd.f32 %v812, %v1198
      %v1233 = vadd.f32 %v815, %v1201
      %v1234 = vadd.f32 %v817, %v1203
      %v1235 = vadd.f32 %v820, %v1206
      %v1236 = vadd.f32 %v822, %v1208
      %v1237 = vadd.f32 %v825, %v1211
      %v1238 = vadd.f32 %v827, %v1213
      %v1239 = vld [vmem:[%s199 + $0x30] sm:$0xff]
      %v1240 = vld [vmem:[%s199 + $0x38] sm:$0xff]
      %v1241 = vld [vmem:[%s199 + $0x40] sm:$0xff]
      %v1242 = vld [vmem:[%s199 + $0x48] sm:$0xff]
      %v1243 = vld [vmem:[%s199 + $0x50] sm:$0xff]
      %v1244 = vld [vmem:[%s199 + $0x58] sm:$0xff]
      %v1245 = vld [vmem:[%s199 + $0x60] sm:$0xff]
      %v1246 = vld [vmem:[%s199 + $0x68] sm:$0xff]
      %v1247 = vld [vmem:[%s199 + $0x70] sm:$0xff]
      %v1248 = vld [vmem:[%s199 + $0x78] sm:$0xff]
      %v1249 = vld [vmem:[%s199 + $0x80] sm:$0xff]
      %v1250 = vld [vmem:[%s199 + $0x88] sm:$0xff]
      %v1251 = vld [vmem:[%s199 + $0x90] sm:$0xff]
      %v1252 = vld [vmem:[%s199 + $0x98] sm:$0xff]
      %v1253 = vld [vmem:[%s199 + $0xa0] sm:$0xff]
      %v1254 = vld [vmem:[%s199 + $0xa8] sm:$0xff]
      %v1255 = vld [vmem:[%s199 + $0xb0] sm:$0xff]
      %v1256 = vld [vmem:[%s199 + $0xb8] sm:$0xff]
      %v1257 = vld [vmem:[%s199 + $0xc0] sm:$0xff]
      %v1258 = vld [vmem:[%s199 + $0xc8] sm:$0xff]
      %v1259 = vld [vmem:[%s199 + $0xd0] sm:$0xff]
      %v1260 = vld [vmem:[%s199 + $0xd8] sm:$0xff]
      %v1261 = vld [vmem:[%s199 + $0xe0] sm:$0xff]
      %v1262 = vld [vmem:[%s199 + $0xe8] sm:$0xff]
      %v1263 = vld [vmem:[%s1 + $0xf0] sm:$0xf]
      %v1264 = vld [vmem:[%s1 + $0xf4] sm:$0xf]
      %v1265 = vld [vmem:[%s1 + $0xf8] sm:$0xf]
      %v1266 = vld [vmem:[%s1 + $0xfc] sm:$0xf]
      %v1267 = vld [vmem:[%s1 + $0x100] sm:$0xf]
      %v1268 = vld [vmem:[%s1 + $0x104] sm:$0xf]
      %v1269 = vld [vmem:[%s1 + $0x108] sm:$0xf]
      %v1270 = vld [vmem:[%s1 + $0x10c] sm:$0xf]
      %v1271 = vld [vmem:[%s1 + $0x110] sm:$0xf]
      %v1272 = vld [vmem:[%s1 + $0x114] sm:$0xf]
      %v1273 = vld [vmem:[%s1 + $0x118] sm:$0xf]
      %v1274 = vld [vmem:[%s1 + $0x11c] sm:$0xf]
      %v1275 = vld [vmem:[%s1 + $0x120] sm:$0xf]
      %v1276 = vld [vmem:[%s1 + $0x124] sm:$0xf]
      %v1277 = vld [vmem:[%s1 + $0x128] sm:$0xf]
      %v1278 = vld [vmem:[%s1 + $0x12c] sm:$0xf]
      %v1279 = vld [vmem:[%s1 + $0x130] sm:$0xf]
      %v1280 = vld [vmem:[%s1 + $0x134] sm:$0xf]
      %v1281 = vld [vmem:[%s1 + $0x138] sm:$0xf]
      %v1282 = vld [vmem:[%s1 + $0x13c] sm:$0xf]
      %v1307 = vunpack.c.l.b16 %v1239
      %v1308 = vunpack.c.h.b16 %v1239
      %v1309 = vunpack.c.l.b16 %v1240
      %v1310 = vunpack.c.h.b16 %v1240
      %v1311 = vunpack.c.l.b16 %v1241
      %v1312 = vunpack.c.h.b16 %v1241
      %v1313 = vunpack.c.l.b16 %v1242
      %v1314 = vunpack.c.h.b16 %v1242
      %v1315 = vunpack.c.l.b16 %v1243
      %v1316 = vunpack.c.h.b16 %v1243
      %v1317 = vunpack.c.l.b16 %v1244
      %v1318 = vunpack.c.h.b16 %v1244
      %v1319 = vunpack.c.l.b16 %v1245
      %v1320 = vunpack.c.h.b16 %v1245
      %v1321 = vunpack.c.l.b16 %v1246
      %v1322 = vunpack.c.h.b16 %v1246
      %v1323 = vunpack.c.l.b16 %v1247
      %v1324 = vunpack.c.h.b16 %v1247
      %v1325 = vunpack.c.l.b16 %v1248
      %v1326 = vunpack.c.h.b16 %v1248
      %v1327 = vunpack.c.l.b16 %v1249
      %v1328 = vunpack.c.h.b16 %v1249
      %v1329 = vunpack.c.l.b16 %v1250
      %v1330 = vunpack.c.h.b16 %v1250
      %v1331 = vunpack.c.l.b16 %v1251
      %v1332 = vunpack.c.h.b16 %v1251
      %v1333 = vunpack.c.l.b16 %v1252
      %v1334 = vunpack.c.h.b16 %v1252
      %v1335 = vunpack.c.l.b16 %v1253
      %v1336 = vunpack.c.h.b16 %v1253
      %v1337 = vunpack.c.l.b16 %v1254
      %v1338 = vunpack.c.h.b16 %v1254
      %v1339 = vunpack.c.l.b16 %v1255
      %v1340 = vunpack.c.h.b16 %v1255
      %v1341 = vunpack.c.l.b16 %v1256
      %v1342 = vunpack.c.h.b16 %v1256
      %v1343 = vunpack.c.l.b16 %v1257
      %v1344 = vunpack.c.h.b16 %v1257
      %v1345 = vunpack.c.l.b16 %v1258
      %v1346 = vunpack.c.h.b16 %v1258
      %v1347 = vunpack.c.l.b16 %v1259
      %v1348 = vunpack.c.h.b16 %v1259
      %v1349 = vunpack.c.l.b16 %v1260
      %v1350 = vunpack.c.h.b16 %v1260
      %v1351 = vunpack.c.l.b16 %v1261
      %v1352 = vunpack.c.h.b16 %v1261
      %v1353 = vunpack.c.l.b16 %v1262
      %v1354 = vunpack.c.h.b16 %v1262
      %v1355 = vpack.c.b16 %v1309, %v1307
      %v1356 = vpack.c.b16 %v1310, %v1308
      %v1357 = vpack.c.b16 %v1313, %v1311
      %v1358 = vpack.c.b16 %v1314, %v1312
      %v1359 = vpack.c.b16 %v1317, %v1315
      %v1360 = vpack.c.b16 %v1318, %v1316
      %v1361 = vpack.c.b16 %v1321, %v1319
      %v1362 = vpack.c.b16 %v1322, %v1320
      %v1363 = vpack.c.b16 %v1325, %v1323
      %v1364 = vpack.c.b16 %v1326, %v1324
      %v1365 = vpack.c.b16 %v1329, %v1327
      %v1366 = vpack.c.b16 %v1330, %v1328
      %v1367 = vpack.c.b16 %v1333, %v1331
      %v1368 = vpack.c.b16 %v1334, %v1332
      %v1369 = vpack.c.b16 %v1337, %v1335
      %v1370 = vpack.c.b16 %v1338, %v1336
      %v1371 = vpack.c.b16 %v1341, %v1339
      %v1372 = vpack.c.b16 %v1342, %v1340
      %v1373 = vpack.c.b16 %v1345, %v1343
      %v1374 = vpack.c.b16 %v1346, %v1344
      %v1375 = vpack.c.b16 %v1349, %v1347
      %v1376 = vpack.c.b16 %v1350, %v1348
      %v1377 = vpack.c.b16 %v1353, %v1351
      %v1378 = vpack.c.b16 %v1354, %v1352
      %v1411 = vunpack.c.l.b16 %v1263
      %v1412 = vunpack.c.l.b16 %v1264
      %v1413 = vunpack.c.l.b16 %v1265
      %v1414 = vunpack.c.l.b16 %v1266
      %v1415 = vunpack.c.l.b16 %v1267
      %v1416 = vunpack.c.l.b16 %v1268
      %v1417 = vunpack.c.l.b16 %v1269
      %v1418 = vunpack.c.l.b16 %v1270
      %v1419 = vunpack.c.l.b16 %v1271
      %v1420 = vunpack.c.l.b16 %v1272
      %v1421 = vunpack.c.l.b16 %v1273
      %v1422 = vunpack.c.l.b16 %v1274
      %v1423 = vunpack.c.l.b16 %v1275
      %v1424 = vunpack.c.l.b16 %v1276
      %v1425 = vunpack.c.l.b16 %v1277
      %v1426 = vunpack.c.l.b16 %v1278
      %v1427 = vunpack.c.l.b16 %v1279
      %v1428 = vunpack.c.l.b16 %v1280
      %v1429 = vunpack.c.l.b16 %v1281
      %v1430 = vunpack.c.l.b16 %v1282
      %v1431 = vpack.c.b16 %v1412, %v1411
      %v1432 = vpack.c.b16 %v1414, %v1413
      %v1433 = vpack.c.b16 %v1416, %v1415
      %v1434 = vpack.c.b16 %v1418, %v1417
      %v1435 = vpack.c.b16 %v1420, %v1419
      %v1436 = vpack.c.b16 %v1422, %v1421
      %v1437 = vpack.c.b16 %v1424, %v1423
      %v1438 = vpack.c.b16 %v1426, %v1425
      %v1439 = vpack.c.b16 %v1428, %v1427
      %v1440 = vpack.c.b16 %v1430, %v1429
      %v1452 = vsel %vm444, %v1356, 0
      %v1455 = vsel %vm444, %v1358, 0
      %v1458 = vsel %vm444, %v1360, 0
      %v1461 = vsel %vm444, %v1362, 0
      %v1464 = vsel %vm444, %v1364, 0
      %v1467 = vsel %vm444, %v1366, 0
      %v1470 = vsel %vm444, %v1368, 0
      %v1473 = vsel %vm444, %v1370, 0
      %v1476 = vsel %vm444, %v1372, 0
      %v1479 = vsel %vm444, %v1374, 0
      %v1482 = vsel %vm444, %v1376, 0
      %v1485 = vsel %vm444, %v1378, 0
      %1487 = vmatpush.bf16.msra.mxu0 %v1438
      %1488 = vmatpush.bf16.msra.mxu0 %v1437
      %1489 = vmatpush.bf16.msra.mxu0 %v1436
      %1490 = vmatpush.bf16.msra.mxu0 %v1435
      %1491 = vmatpush.bf16.msra.mxu0 %v1434
      %1492 = vmatpush.bf16.msra.mxu0 %v1433
      %1493 = vmatpush.bf16.msra.mxu0 %v1432
      %1494 = vmatpush.bf16.msra.mxu0 %v1431
      %1495 = vmatmul.bf16.gmra.mxu0 %v1355
      %v1496 = vpop.f32.mrf.mxu0
      %v1497 = vadd.f32 0.0, %v1496
      %v1498 = vpop.f32.mrf.mxu0
      %v1499 = vadd.f32 0.0, %v1498
      %1500 = vmatmul.bf16.gmra.mxu0 %v1357
      %v1501 = vpop.f32.mrf.mxu0
      %v1502 = vadd.f32 0.0, %v1501
      %v1503 = vpop.f32.mrf.mxu0
      %v1504 = vadd.f32 0.0, %v1503
      %1505 = vmatmul.bf16.gmra.mxu0 %v1359
      %v1506 = vpop.f32.mrf.mxu0
      %v1507 = vadd.f32 0.0, %v1506
      %v1508 = vpop.f32.mrf.mxu0
      %v1509 = vadd.f32 0.0, %v1508
      %1510 = vmatmul.bf16.gmra.mxu0 %v1361
      %v1511 = vpop.f32.mrf.mxu0
      %v1512 = vadd.f32 0.0, %v1511
      %v1513 = vpop.f32.mrf.mxu0
      %v1514 = vadd.f32 0.0, %v1513
      %1515 = vmatmul.bf16.gmra.mxu0 %v1363
      %v1516 = vpop.f32.mrf.mxu0
      %v1517 = vadd.f32 0.0, %v1516
      %v1518 = vpop.f32.mrf.mxu0
      %v1519 = vadd.f32 0.0, %v1518
      %1520 = vmatmul.bf16.gmra.mxu0 %v1365
      %v1521 = vpop.f32.mrf.mxu0
      %v1522 = vadd.f32 0.0, %v1521
      %v1523 = vpop.f32.mrf.mxu0
      %v1524 = vadd.f32 0.0, %v1523
      %1525 = vmatmul.bf16.gmra.mxu0 %v1367
      %v1526 = vpop.f32.mrf.mxu0
      %v1527 = vadd.f32 0.0, %v1526
      %v1528 = vpop.f32.mrf.mxu0
      %v1529 = vadd.f32 0.0, %v1528
      %1530 = vmatmul.bf16.gmra.mxu0 %v1369
      %v1531 = vpop.f32.mrf.mxu0
      %v1532 = vadd.f32 0.0, %v1531
      %v1533 = vpop.f32.mrf.mxu0
      %v1534 = vadd.f32 0.0, %v1533
      %1535 = vmatmul.bf16.gmra.mxu0 %v1371
      %v1536 = vpop.f32.mrf.mxu0
      %v1537 = vadd.f32 0.0, %v1536
      %v1538 = vpop.f32.mrf.mxu0
      %v1539 = vadd.f32 0.0, %v1538
      %1540 = vmatmul.bf16.gmra.mxu0 %v1373
      %v1541 = vpop.f32.mrf.mxu0
      %v1542 = vadd.f32 0.0, %v1541
      %v1543 = vpop.f32.mrf.mxu0
      %v1544 = vadd.f32 0.0, %v1543
      %1545 = vmatmul.bf16.gmra.mxu0 %v1375
      %v1546 = vpop.f32.mrf.mxu0
      %v1547 = vadd.f32 0.0, %v1546
      %v1548 = vpop.f32.mrf.mxu0
      %v1549 = vadd.f32 0.0, %v1548
      %1550 = vmatmul.bf16.gmra.mxu0 %v1377
      %v1551 = vpop.f32.mrf.mxu0
      %v1552 = vadd.f32 0.0, %v1551
      %v1553 = vpop.f32.mrf.mxu0
      %v1554 = vadd.f32 0.0, %v1553
      %1555 = vdwg.mxu0
      %1556 = vmatpush.bf16.msra.mxu0 0
      %1557 = vmatpush.bf16.msra.mxu0 0
      %1558 = vmatpush.bf16.msra.mxu0 0
      %1559 = vmatpush.bf16.msra.mxu0 0
      %1560 = vmatpush.bf16.msra.mxu0 0
      %1561 = vmatpush.bf16.msra.mxu0 0
      %1562 = vmatpush.bf16.msra.mxu0 %v1440
      %1563 = vmatpush.bf16.msra.mxu0 %v1439
      %1564 = vmatmul.bf16.gmra.mxu0 %v1452
      %v1565 = vpop.f32.mrf.mxu0
      %v1566 = vadd.f32 %v1497, %v1565
      %v1567 = vpop.f32.mrf.mxu0
      %v1568 = vadd.f32 %v1499, %v1567
      %1569 = vmatmul.bf16.gmra.mxu0 %v1455
      %v1570 = vpop.f32.mrf.mxu0
      %v1571 = vadd.f32 %v1502, %v1570
      %v1572 = vpop.f32.mrf.mxu0
      %v1573 = vadd.f32 %v1504, %v1572
      %1574 = vmatmul.bf16.gmra.mxu0 %v1458
      %v1575 = vpop.f32.mrf.mxu0
      %v1576 = vadd.f32 %v1507, %v1575
      %v1577 = vpop.f32.mrf.mxu0
      %v1578 = vadd.f32 %v1509, %v1577
      %1579 = vmatmul.bf16.gmra.mxu0 %v1461
      %v1580 = vpop.f32.mrf.mxu0
      %v1581 = vadd.f32 %v1512, %v1580
      %v1582 = vpop.f32.mrf.mxu0
      %v1583 = vadd.f32 %v1514, %v1582
      %1584 = vmatmul.bf16.gmra.mxu0 %v1464
      %v1585 = vpop.f32.mrf.mxu0
      %v1586 = vadd.f32 %v1517, %v1585
      %v1587 = vpop.f32.mrf.mxu0
      %v1588 = vadd.f32 %v1519, %v1587
      %1589 = vmatmul.bf16.gmra.mxu0 %v1467
      %v1590 = vpop.f32.mrf.mxu0
      %v1591 = vadd.f32 %v1522, %v1590
      %v1592 = vpop.f32.mrf.mxu0
      %v1593 = vadd.f32 %v1524, %v1592
      %1594 = vmatmul.bf16.gmra.mxu0 %v1470
      %v1595 = vpop.f32.mrf.mxu0
      %v1596 = vadd.f32 %v1527, %v1595
      %v1597 = vpop.f32.mrf.mxu0
      %v1598 = vadd.f32 %v1529, %v1597
      %1599 = vmatmul.bf16.gmra.mxu0 %v1473
      %v1600 = vpop.f32.mrf.mxu0
      %v1601 = vadd.f32 %v1532, %v1600
      %v1602 = vpop.f32.mrf.mxu0
      %v1603 = vadd.f32 %v1534, %v1602
      %1604 = vmatmul.bf16.gmra.mxu0 %v1476
      %v1605 = vpop.f32.mrf.mxu0
      %v1606 = vadd.f32 %v1537, %v1605
      %v1607 = vpop.f32.mrf.mxu0
      %v1608 = vadd.f32 %v1539, %v1607
      %1609 = vmatmul.bf16.gmra.mxu0 %v1479
      %v1610 = vpop.f32.mrf.mxu0
      %v1611 = vadd.f32 %v1542, %v1610
      %v1612 = vpop.f32.mrf.mxu0
      %v1613 = vadd.f32 %v1544, %v1612
      %1614 = vmatmul.bf16.gmra.mxu0 %v1482
      %v1615 = vpop.f32.mrf.mxu0
      %v1616 = vadd.f32 %v1547, %v1615
      %v1617 = vpop.f32.mrf.mxu0
      %v1618 = vadd.f32 %v1549, %v1617
      %1619 = vmatmul.bf16.gmra.mxu0 %v1485
      %v1620 = vpop.f32.mrf.mxu0
      %v1621 = vadd.f32 %v1552, %v1620
      %v1622 = vpop.f32.mrf.mxu0
      %v1623 = vadd.f32 %v1554, %v1622
      %1624 = vdwg.mxu0
      %v1625 = vadd.f32 %v1215, %v1566
      %v1626 = vadd.f32 %v1216, %v1568
      %v1627 = vadd.f32 %v1217, %v1571
      %v1628 = vadd.f32 %v1218, %v1573
      %v1629 = vadd.f32 %v1219, %v1576
      %v1630 = vadd.f32 %v1220, %v1578
      %v1631 = vadd.f32 %v1221, %v1581
      %v1632 = vadd.f32 %v1222, %v1583
      %v1633 = vadd.f32 %v1223, %v1586
      %v1634 = vadd.f32 %v1224, %v1588
      %v1635 = vadd.f32 %v1225, %v1591
      %v1636 = vadd.f32 %v1226, %v1593
      %v1637 = vadd.f32 %v1227, %v1596
      %v1638 = vadd.f32 %v1228, %v1598
      %v1639 = vadd.f32 %v1229, %v1601
      %v1640 = vadd.f32 %v1230, %v1603
      %v1641 = vadd.f32 %v1231, %v1606
      %v1642 = vadd.f32 %v1232, %v1608
      %v1643 = vadd.f32 %v1233, %v1611
      %v1644 = vadd.f32 %v1234, %v1613
      %v1645 = vadd.f32 %v1235, %v1616
      %v1646 = vadd.f32 %v1236, %v1618
      %v1647 = vadd.f32 %v1237, %v1621
      %v1648 = vadd.f32 %v1238, %v1623
      %v1649 = vld [vmem:[%s199 + $0x40] sm:$0xff]
      %v1650 = vld [vmem:[%s199 + $0x48] sm:$0xff]
      %v1651 = vld [vmem:[%s199 + $0x50] sm:$0xff]
      %v1652 = vld [vmem:[%s199 + $0x58] sm:$0xff]
      %v1653 = vld [vmem:[%s199 + $0x60] sm:$0xff]
      %v1654 = vld [vmem:[%s199 + $0x68] sm:$0xff]
      %v1655 = vld [vmem:[%s199 + $0x70] sm:$0xff]
      %v1656 = vld [vmem:[%s199 + $0x78] sm:$0xff]
      %v1657 = vld [vmem:[%s199 + $0x80] sm:$0xff]
      %v1658 = vld [vmem:[%s199 + $0x88] sm:$0xff]
      %v1659 = vld [vmem:[%s199 + $0x90] sm:$0xff]
      %v1660 = vld [vmem:[%s199 + $0x98] sm:$0xff]
      %v1661 = vld [vmem:[%s199 + $0xa0] sm:$0xff]
      %v1662 = vld [vmem:[%s199 + $0xa8] sm:$0xff]
      %v1663 = vld [vmem:[%s199 + $0xb0] sm:$0xff]
      %v1664 = vld [vmem:[%s199 + $0xb8] sm:$0xff]
      %v1665 = vld [vmem:[%s199 + $0xc0] sm:$0xff]
      %v1666 = vld [vmem:[%s199 + $0xc8] sm:$0xff]
      %v1667 = vld [vmem:[%s199 + $0xd0] sm:$0xff]
      %v1668 = vld [vmem:[%s199 + $0xd8] sm:$0xff]
      %v1669 = vld [vmem:[%s199 + $0xe0] sm:$0xff]
      %v1670 = vld [vmem:[%s199 + $0xe8] sm:$0xff]
      %v1671 = vld [vmem:[%s199 + $0xf0] sm:$0xff]
      %v1672 = vld [vmem:[%s199 + $0xf8] sm:$0xff]
      %v1673 = vld [vmem:[%s1 + $0x140] sm:$0xf]
      %v1674 = vld [vmem:[%s1 + $0x144] sm:$0xf]
      %v1675 = vld [vmem:[%s1 + $0x148] sm:$0xf]
      %v1676 = vld [vmem:[%s1 + $0x14c] sm:$0xf]
      %v1677 = vld [vmem:[%s1 + $0x150] sm:$0xf]
      %v1678 = vld [vmem:[%s1 + $0x154] sm:$0xf]
      %v1679 = vld [vmem:[%s1 + $0x158] sm:$0xf]
      %v1680 = vld [vmem:[%s1 + $0x15c] sm:$0xf]
      %v1681 = vld [vmem:[%s1 + $0x160] sm:$0xf]
      %v1682 = vld [vmem:[%s1 + $0x164] sm:$0xf]
      %v1683 = vld [vmem:[%s1 + $0x168] sm:$0xf]
      %v1684 = vld [vmem:[%s1 + $0x16c] sm:$0xf]
      %v1685 = vld [vmem:[%s1 + $0x170] sm:$0xf]
      %v1686 = vld [vmem:[%s1 + $0x174] sm:$0xf]
      %v1687 = vld [vmem:[%s1 + $0x178] sm:$0xf]
      %v1688 = vld [vmem:[%s1 + $0x17c] sm:$0xf]
      %v1689 = vld [vmem:[%s1 + $0x180] sm:$0xf]
      %v1690 = vld [vmem:[%s1 + $0x184] sm:$0xf]
      %v1691 = vld [vmem:[%s1 + $0x188] sm:$0xf]
      %v1692 = vld [vmem:[%s1 + $0x18c] sm:$0xf]
      %v1717 = vunpack.c.l.b16 %v1649
      %v1718 = vunpack.c.h.b16 %v1649
      %v1719 = vunpack.c.l.b16 %v1650
      %v1720 = vunpack.c.h.b16 %v1650
      %v1721 = vunpack.c.l.b16 %v1651
      %v1722 = vunpack.c.h.b16 %v1651
      %v1723 = vunpack.c.l.b16 %v1652
      %v1724 = vunpack.c.h.b16 %v1652
      %v1725 = vunpack.c.l.b16 %v1653
      %v1726 = vunpack.c.h.b16 %v1653
      %v1727 = vunpack.c.l.b16 %v1654
      %v1728 = vunpack.c.h.b16 %v1654
      %v1729 = vunpack.c.l.b16 %v1655
      %v1730 = vunpack.c.h.b16 %v1655
      %v1731 = vunpack.c.l.b16 %v1656
      %v1732 = vunpack.c.h.b16 %v1656
      %v1733 = vunpack.c.l.b16 %v1657
      %v1734 = vunpack.c.h.b16 %v1657
      %v1735 = vunpack.c.l.b16 %v1658
      %v1736 = vunpack.c.h.b16 %v1658
      %v1737 = vunpack.c.l.b16 %v1659
      %v1738 = vunpack.c.h.b16 %v1659
      %v1739 = vunpack.c.l.b16 %v1660
      %v1740 = vunpack.c.h.b16 %v1660
      %v1741 = vunpack.c.l.b16 %v1661
      %v1742 = vunpack.c.h.b16 %v1661
      %v1743 = vunpack.c.l.b16 %v1662
      %v1744 = vunpack.c.h.b16 %v1662
      %v1745 = vunpack.c.l.b16 %v1663
      %v1746 = vunpack.c.h.b16 %v1663
      %v1747 = vunpack.c.l.b16 %v1664
      %v1748 = vunpack.c.h.b16 %v1664
      %v1749 = vunpack.c.l.b16 %v1665
      %v1750 = vunpack.c.h.b16 %v1665
      %v1751 = vunpack.c.l.b16 %v1666
      %v1752 = vunpack.c.h.b16 %v1666
      %v1753 = vunpack.c.l.b16 %v1667
      %v1754 = vunpack.c.h.b16 %v1667
      %v1755 = vunpack.c.l.b16 %v1668
      %v1756 = vunpack.c.h.b16 %v1668
      %v1757 = vunpack.c.l.b16 %v1669
      %v1758 = vunpack.c.h.b16 %v1669
      %v1759 = vunpack.c.l.b16 %v1670
      %v1760 = vunpack.c.h.b16 %v1670
      %v1761 = vunpack.c.l.b16 %v1671
      %v1762 = vunpack.c.h.b16 %v1671
      %v1763 = vunpack.c.l.b16 %v1672
      %v1764 = vunpack.c.h.b16 %v1672
      %v1765 = vpack.c.b16 %v1719, %v1717
      %v1766 = vpack.c.b16 %v1720, %v1718
      %v1767 = vpack.c.b16 %v1723, %v1721
      %v1768 = vpack.c.b16 %v1724, %v1722
      %v1769 = vpack.c.b16 %v1727, %v1725
      %v1770 = vpack.c.b16 %v1728, %v1726
      %v1771 = vpack.c.b16 %v1731, %v1729
      %v1772 = vpack.c.b16 %v1732, %v1730
      %v1773 = vpack.c.b16 %v1735, %v1733
      %v1774 = vpack.c.b16 %v1736, %v1734
      %v1775 = vpack.c.b16 %v1739, %v1737
      %v1776 = vpack.c.b16 %v1740, %v1738
      %v1777 = vpack.c.b16 %v1743, %v1741
      %v1778 = vpack.c.b16 %v1744, %v1742
      %v1779 = vpack.c.b16 %v1747, %v1745
      %v1780 = vpack.c.b16 %v1748, %v1746
      %v1781 = vpack.c.b16 %v1751, %v1749
      %v1782 = vpack.c.b16 %v1752, %v1750
      %v1783 = vpack.c.b16 %v1755, %v1753
      %v1784 = vpack.c.b16 %v1756, %v1754
      %v1785 = vpack.c.b16 %v1759, %v1757
      %v1786 = vpack.c.b16 %v1760, %v1758
      %v1787 = vpack.c.b16 %v1763, %v1761
      %v1788 = vpack.c.b16 %v1764, %v1762
      %v1821 = vunpack.c.l.b16 %v1673
      %v1822 = vunpack.c.l.b16 %v1674
      %v1823 = vunpack.c.l.b16 %v1675
      %v1824 = vunpack.c.l.b16 %v1676
      %v1825 = vunpack.c.l.b16 %v1677
      %v1826 = vunpack.c.l.b16 %v1678
      %v1827 = vunpack.c.l.b16 %v1679
      %v1828 = vunpack.c.l.b16 %v1680
      %v1829 = vunpack.c.l.b16 %v1681
      %v1830 = vunpack.c.l.b16 %v1682
      %v1831 = vunpack.c.l.b16 %v1683
      %v1832 = vunpack.c.l.b16 %v1684
      %v1833 = vunpack.c.l.b16 %v1685
      %v1834 = vunpack.c.l.b16 %v1686
      %v1835 = vunpack.c.l.b16 %v1687
      %v1836 = vunpack.c.l.b16 %v1688
      %v1837 = vunpack.c.l.b16 %v1689
      %v1838 = vunpack.c.l.b16 %v1690
      %v1839 = vunpack.c.l.b16 %v1691
      %v1840 = vunpack.c.l.b16 %v1692
      %v1841 = vpack.c.b16 %v1822, %v1821
      %v1842 = vpack.c.b16 %v1824, %v1823
      %v1843 = vpack.c.b16 %v1826, %v1825
      %v1844 = vpack.c.b16 %v1828, %v1827
      %v1845 = vpack.c.b16 %v1830, %v1829
      %v1846 = vpack.c.b16 %v1832, %v1831
      %v1847 = vpack.c.b16 %v1834, %v1833
      %v1848 = vpack.c.b16 %v1836, %v1835
      %v1849 = vpack.c.b16 %v1838, %v1837
      %v1850 = vpack.c.b16 %v1840, %v1839
      %v1862 = vsel %vm444, %v1766, 0
      %v1865 = vsel %vm444, %v1768, 0
      %v1868 = vsel %vm444, %v1770, 0
      %v1871 = vsel %vm444, %v1772, 0
      %v1874 = vsel %vm444, %v1774, 0
      %v1877 = vsel %vm444, %v1776, 0
      %v1880 = vsel %vm444, %v1778, 0
      %v1883 = vsel %vm444, %v1780, 0
      %v1886 = vsel %vm444, %v1782, 0
      %v1889 = vsel %vm444, %v1784, 0
      %v1892 = vsel %vm444, %v1786, 0
      %v1895 = vsel %vm444, %v1788, 0
      %1897 = vmatpush.bf16.msra.mxu0 %v1848
      %1898 = vmatpush.bf16.msra.mxu0 %v1847
      %1899 = vmatpush.bf16.msra.mxu0 %v1846
      %1900 = vmatpush.bf16.msra.mxu0 %v1845
      %1901 = vmatpush.bf16.msra.mxu0 %v1844
      %1902 = vmatpush.bf16.msra.mxu0 %v1843
      %1903 = vmatpush.bf16.msra.mxu0 %v1842
      %1904 = vmatpush.bf16.msra.mxu0 %v1841
      %1905 = vmatmul.bf16.gmra.mxu0 %v1765
      %v1906 = vpop.f32.mrf.mxu0
      %v1907 = vadd.f32 0.0, %v1906
      %v1908 = vpop.f32.mrf.mxu0
      %v1909 = vadd.f32 0.0, %v1908
      %1910 = vmatmul.bf16.gmra.mxu0 %v1767
      %v1911 = vpop.f32.mrf.mxu0
      %v1912 = vadd.f32 0.0, %v1911
      %v1913 = vpop.f32.mrf.mxu0
      %v1914 = vadd.f32 0.0, %v1913
      %1915 = vmatmul.bf16.gmra.mxu0 %v1769
      %v1916 = vpop.f32.mrf.mxu0
      %v1917 = vadd.f32 0.0, %v1916
      %v1918 = vpop.f32.mrf.mxu0
      %v1919 = vadd.f32 0.0, %v1918
      %1920 = vmatmul.bf16.gmra.mxu0 %v1771
      %v1921 = vpop.f32.mrf.mxu0
      %v1922 = vadd.f32 0.0, %v1921
      %v1923 = vpop.f32.mrf.mxu0
      %v1924 = vadd.f32 0.0, %v1923
      %1925 = vmatmul.bf16.gmra.mxu0 %v1773
      %v1926 = vpop.f32.mrf.mxu0
      %v1927 = vadd.f32 0.0, %v1926
      %v1928 = vpop.f32.mrf.mxu0
      %v1929 = vadd.f32 0.0, %v1928
      %1930 = vmatmul.bf16.gmra.mxu0 %v1775
      %v1931 = vpop.f32.mrf.mxu0
      %v1932 = vadd.f32 0.0, %v1931
      %v1933 = vpop.f32.mrf.mxu0
      %v1934 = vadd.f32 0.0, %v1933
      %1935 = vmatmul.bf16.gmra.mxu0 %v1777
      %v1936 = vpop.f32.mrf.mxu0
      %v1937 = vadd.f32 0.0, %v1936
      %v1938 = vpop.f32.mrf.mxu0
      %v1939 = vadd.f32 0.0, %v1938
      %1940 = vmatmul.bf16.gmra.mxu0 %v1779
      %v1941 = vpop.f32.mrf.mxu0
      %v1942 = vadd.f32 0.0, %v1941
      %v1943 = vpop.f32.mrf.mxu0
      %v1944 = vadd.f32 0.0, %v1943
      %1945 = vmatmul.bf16.gmra.mxu0 %v1781
      %v1946 = vpop.f32.mrf.mxu0
      %v1947 = vadd.f32 0.0, %v1946
      %v1948 = vpop.f32.mrf.mxu0
      %v1949 = vadd.f32 0.0, %v1948
      %1950 = vmatmul.bf16.gmra.mxu0 %v1783
      %v1951 = vpop.f32.mrf.mxu0
      %v1952 = vadd.f32 0.0, %v1951
      %v1953 = vpop.f32.mrf.mxu0
      %v1954 = vadd.f32 0.0, %v1953
      %1955 = vmatmul.bf16.gmra.mxu0 %v1785
      %v1956 = vpop.f32.mrf.mxu0
      %v1957 = vadd.f32 0.0, %v1956
      %v1958 = vpop.f32.mrf.mxu0
      %v1959 = vadd.f32 0.0, %v1958
      %1960 = vmatmul.bf16.gmra.mxu0 %v1787
      %v1961 = vpop.f32.mrf.mxu0
      %v1962 = vadd.f32 0.0, %v1961
      %v1963 = vpop.f32.mrf.mxu0
      %v1964 = vadd.f32 0.0, %v1963
      %1965 = vdwg.mxu0
      %1966 = vmatpush.bf16.msra.mxu0 0
      %1967 = vmatpush.bf16.msra.mxu0 0
      %1968 = vmatpush.bf16.msra.mxu0 0
      %1969 = vmatpush.bf16.msra.mxu0 0
      %1970 = vmatpush.bf16.msra.mxu0 0
      %1971 = vmatpush.bf16.msra.mxu0 0
      %1972 = vmatpush.bf16.msra.mxu0 %v1850
      %1973 = vmatpush.bf16.msra.mxu0 %v1849
      %1974 = vmatmul.bf16.gmra.mxu0 %v1862
      %v1975 = vpop.f32.mrf.mxu0
      %v1976 = vadd.f32 %v1907, %v1975
      %v1977 = vpop.f32.mrf.mxu0
      %v1978 = vadd.f32 %v1909, %v1977
      %1979 = vmatmul.bf16.gmra.mxu0 %v1865
      %v1980 = vpop.f32.mrf.mxu0
      %v1981 = vadd.f32 %v1912, %v1980
      %v1982 = vpop.f32.mrf.mxu0
      %v1983 = vadd.f32 %v1914, %v1982
      %1984 = vmatmul.bf16.gmra.mxu0 %v1868
      %v1985 = vpop.f32.mrf.mxu0
      %v1986 = vadd.f32 %v1917, %v1985
      %v1987 = vpop.f32.mrf.mxu0
      %v1988 = vadd.f32 %v1919, %v1987
      %1989 = vmatmul.bf16.gmra.mxu0 %v1871
      %v1990 = vpop.f32.mrf.mxu0
      %v1991 = vadd.f32 %v1922, %v1990
      %v1992 = vpop.f32.mrf.mxu0
      %v1993 = vadd.f32 %v1924, %v1992
      %1994 = vmatmul.bf16.gmra.mxu0 %v1874
      %v1995 = vpop.f32.mrf.mxu0
      %v1996 = vadd.f32 %v1927, %v1995
      %v1997 = vpop.f32.mrf.mxu0
      %v1998 = vadd.f32 %v1929, %v1997
      %1999 = vmatmul.bf16.gmra.mxu0 %v1877
      %v2000 = vpop.f32.mrf.mxu0
      %v2001 = vadd.f32 %v1932, %v2000
      %v2002 = vpop.f32.mrf.mxu0
      %v2003 = vadd.f32 %v1934, %v2002
      %2004 = vmatmul.bf16.gmra.mxu0 %v1880
      %v2005 = vpop.f32.mrf.mxu0
      %v2006 = vadd.f32 %v1937, %v2005
      %v2007 = vpop.f32.mrf.mxu0
      %v2008 = vadd.f32 %v1939, %v2007
      %2009 = vmatmul.bf16.gmra.mxu0 %v1883
      %v2010 = vpop.f32.mrf.mxu0
      %v2011 = vadd.f32 %v1942, %v2010
      %v2012 = vpop.f32.mrf.mxu0
      %v2013 = vadd.f32 %v1944, %v2012
      %2014 = vmatmul.bf16.gmra.mxu0 %v1886
      %v2015 = vpop.f32.mrf.mxu0
      %v2016 = vadd.f32 %v1947, %v2015
      %v2017 = vpop.f32.mrf.mxu0
      %v2018 = vadd.f32 %v1949, %v2017
      %2019 = vmatmul.bf16.gmra.mxu0 %v1889
      %v2020 = vpop.f32.mrf.mxu0
      %v2021 = vadd.f32 %v1952, %v2020
      %v2022 = vpop.f32.mrf.mxu0
      %v2023 = vadd.f32 %v1954, %v2022
      %2024 = vmatmul.bf16.gmra.mxu0 %v1892
      %v2025 = vpop.f32.mrf.mxu0
      %v2026 = vadd.f32 %v1957, %v2025
      %v2027 = vpop.f32.mrf.mxu0
      %v2028 = vadd.f32 %v1959, %v2027
      %2029 = vmatmul.bf16.gmra.mxu0 %v1895
      %v2030 = vpop.f32.mrf.mxu0
      %v2031 = vadd.f32 %v1962, %v2030
      %v2032 = vpop.f32.mrf.mxu0
      %v2033 = vadd.f32 %v1964, %v2032
      %2034 = vdwg.mxu0
      %v2035 = vadd.f32 %v1625, %v1976
      %v2036 = vadd.f32 %v1626, %v1978
      %v2037 = vadd.f32 %v1627, %v1981
      %v2038 = vadd.f32 %v1628, %v1983
      %v2039 = vadd.f32 %v1629, %v1986
      %v2040 = vadd.f32 %v1630, %v1988
      %v2041 = vadd.f32 %v1631, %v1991
      %v2042 = vadd.f32 %v1632, %v1993
      %v2043 = vadd.f32 %v1633, %v1996
      %v2044 = vadd.f32 %v1634, %v1998
      %v2045 = vadd.f32 %v1635, %v2001
      %v2046 = vadd.f32 %v1636, %v2003
      %v2047 = vadd.f32 %v1637, %v2006
      %v2048 = vadd.f32 %v1638, %v2008
      %v2049 = vadd.f32 %v1639, %v2011
      %v2050 = vadd.f32 %v1640, %v2013
      %v2051 = vadd.f32 %v1641, %v2016
      %v2052 = vadd.f32 %v1642, %v2018
      %v2053 = vadd.f32 %v1643, %v2021
      %v2054 = vadd.f32 %v1644, %v2023
      %v2055 = vadd.f32 %v1645, %v2026
      %v2056 = vadd.f32 %v1646, %v2028
      %v2057 = vadd.f32 %v1647, %v2031
      %v2058 = vadd.f32 %v1648, %v2033
      %v2059 = vld [vmem:[%s2] sm:$0x1]
      %v2061 = vperm.slane %v2059, 0
      %v2063 = vadd.f32 %v2035, %v2061
      %v2064 = vadd.f32 %v2036, %v2061
      %v2065 = vadd.f32 %v2037, %v2061
      %v2066 = vadd.f32 %v2038, %v2061
      %v2067 = vadd.f32 %v2039, %v2061
      %v2068 = vadd.f32 %v2040, %v2061
      %v2069 = vadd.f32 %v2041, %v2061
      %v2070 = vadd.f32 %v2042, %v2061
      %v2071 = vadd.f32 %v2043, %v2061
      %v2072 = vadd.f32 %v2044, %v2061
      %v2073 = vadd.f32 %v2045, %v2061
      %v2074 = vadd.f32 %v2046, %v2061
      %v2075 = vadd.f32 %v2047, %v2061
      %v2076 = vadd.f32 %v2048, %v2061
      %v2077 = vadd.f32 %v2049, %v2061
      %v2078 = vadd.f32 %v2050, %v2061
      %v2079 = vadd.f32 %v2051, %v2061
      %v2080 = vadd.f32 %v2052, %v2061
      %v2081 = vadd.f32 %v2053, %v2061
      %v2082 = vadd.f32 %v2054, %v2061
      %v2083 = vadd.f32 %v2055, %v2061
      %v2084 = vadd.f32 %v2056, %v2061
      %v2085 = vadd.f32 %v2057, %v2061
      %v2086 = vadd.f32 %v2058, %v2061
      %v2087 = vmax.f32 %v2063, 0.0
      %v2088 = vmax.f32 %v2064, 0.0
      %v2089 = vmax.f32 %v2065, 0.0
      %v2090 = vmax.f32 %v2066, 0.0
      %v2091 = vmax.f32 %v2067, 0.0
      %v2092 = vmax.f32 %v2068, 0.0
      %v2093 = vmax.f32 %v2069, 0.0
      %v2094 = vmax.f32 %v2070, 0.0
      %v2095 = vmax.f32 %v2071, 0.0
      %v2096 = vmax.f32 %v2072, 0.0
      %v2097 = vmax.f32 %v2073, 0.0
      %v2098 = vmax.f32 %v2074, 0.0
      %v2099 = vmax.f32 %v2075, 0.0
      %v2100 = vmax.f32 %v2076, 0.0
      %v2101 = vmax.f32 %v2077, 0.0
      %v2102 = vmax.f32 %v2078, 0.0
      %v2103 = vmax.f32 %v2079, 0.0
      %v2104 = vmax.f32 %v2080, 0.0
      %v2105 = vmax.f32 %v2081, 0.0
      %v2106 = vmax.f32 %v2082, 0.0
      %v2107 = vmax.f32 %v2083, 0.0
      %v2108 = vmax.f32 %v2084, 0.0
      %v2109 = vmax.f32 %v2085, 0.0
      %v2110 = vmax.f32 %v2086, 0.0
      %v2111 = vpack.c.bf16 %v2087, %v2087
      %v2112 = vpack.c.bf16 %v2088, %v2088
      %v2113 = vpack.c.bf16 %v2089, %v2089
      %v2114 = vpack.c.bf16 %v2090, %v2090
      %v2115 = vpack.c.bf16 %v2091, %v2091
      %v2116 = vpack.c.bf16 %v2092, %v2092
      %v2117 = vpack.c.bf16 %v2093, %v2093
      %v2118 = vpack.c.bf16 %v2094, %v2094
      %v2119 = vpack.c.bf16 %v2095, %v2095
      %v2120 = vpack.c.bf16 %v2096, %v2096
      %v2121 = vpack.c.bf16 %v2097, %v2097
      %v2122 = vpack.c.bf16 %v2098, %v2098
      %v2123 = vpack.c.bf16 %v2099, %v2099
      %v2124 = vpack.c.bf16 %v2100, %v2100
      %v2125 = vpack.c.bf16 %v2101, %v2101
      %v2126 = vpack.c.bf16 %v2102, %v2102
      %v2127 = vpack.c.bf16 %v2103, %v2103
      %v2128 = vpack.c.bf16 %v2104, %v2104
      %v2129 = vpack.c.bf16 %v2105, %v2105
      %v2130 = vpack.c.bf16 %v2106, %v2106
      %v2131 = vpack.c.bf16 %v2107, %v2107
      %v2132 = vpack.c.bf16 %v2108, %v2108
      %v2133 = vpack.c.bf16 %v2109, %v2109
      %v2134 = vpack.c.bf16 %v2110, %v2110
      %2135 = vst [vmem:[%s204] sm:$0xf] %v2111
      %2136 = vst [vmem:[%s204 + $0x4] sm:$0xf] %v2112
      %2137 = vst [vmem:[%s204 + $0x8] sm:$0xf] %v2113
      %2138 = vst [vmem:[%s204 + $0xc] sm:$0xf] %v2114
      %2139 = vst [vmem:[%s204 + $0x10] sm:$0xf] %v2115
      %2140 = vst [vmem:[%s204 + $0x14] sm:$0xf] %v2116
      %2141 = vst [vmem:[%s204 + $0x18] sm:$0xf] %v2117
      %2142 = vst [vmem:[%s204 + $0x1c] sm:$0xf] %v2118
      %2143 = vst [vmem:[%s204 + $0x20] sm:$0xf] %v2119
      %2144 = vst [vmem:[%s204 + $0x24] sm:$0xf] %v2120
      %2145 = vst [vmem:[%s204 + $0x28] sm:$0xf] %v2121
      %2146 = vst [vmem:[%s204 + $0x2c] sm:$0xf] %v2122
      %2147 = vst [vmem:[%s204 + $0x30] sm:$0xf] %v2123
      %2148 = vst [vmem:[%s204 + $0x34] sm:$0xf] %v2124
      %2149 = vst [vmem:[%s204 + $0x38] sm:$0xf] %v2125
      %2150 = vst [vmem:[%s204 + $0x3c] sm:$0xf] %v2126
      %2151 = vst [vmem:[%s204 + $0x40] sm:$0xf] %v2127
      %2152 = vst [vmem:[%s204 + $0x44] sm:$0xf] %v2128
      %2153 = vst [vmem:[%s204 + $0x48] sm:$0xf] %v2129
      %2154 = vst [vmem:[%s204 + $0x4c] sm:$0xf] %v2130
      %2155 = vst [vmem:[%s204 + $0x50] sm:$0xf] %v2131
      %2156 = vst [vmem:[%s204 + $0x54] sm:$0xf] %v2132
      %2157 = vst [vmem:[%s204 + $0x58] sm:$0xf] %v2133
      %2158 = vst [vmem:[%s204 + $0x5c] sm:$0xf] %v2134
      %v2159 = vlaneseq
      %v2160 = vshrl.u32 %v2159, 7
      %v2161 = vadd.s32 %v2160, 8
      %v2162 = vadd.s32 %v2160, 16
      %v2163 = vadd.s32 %v2160, 24
      %v2164 = vadd.s32 %v2160, 32
      %v2165 = vadd.s32 %v2160, 40
      %v2166 = vadd.s32 %v2160, 48
      %v2167 = vadd.s32 %v2160, 56
      %v2168 = vadd.s32 %v2160, 64
      %v2169 = vadd.s32 %v2160, 72
      %v2170 = vadd.s32 %v2160, 80
      %v2171 = vadd.s32 %v2160, 88
      %v2172 = vadd.s32 %v2160, 96
      %v2173 = vadd.s32 %v2160, 104
      %v2174 = vadd.s32 %v2160, 112
      %v2175 = vadd.s32 %v2160, 120
      %v2176 = vadd.s32 %v2160, 128
      %v2177 = vadd.s32 %v2160, 136
      %v2178 = vadd.s32 %v2160, 144
      %v2179 = vadd.s32 %v2160, 152
      %v2180 = vadd.s32 %v2160, 160
      %v2181 = vadd.s32 %v2160, 168
      %v2182 = vadd.s32 %v2160, 176
      %v2183 = vadd.s32 %v2160, 184
      %vm2184 = vcmp.lt.s32.totalorder %v2160, 0
      %v2185 = vsub.s32 0, %v2160
      %v2186 = vsel %vm2184, %v2185, %v2160
      %v2187 = vshrl.u32 %v2186, 4
      %v2188 = vand.u32 %v2186, 15
      %v2189 = vsub.s32 0, %v2188
      %v2190 = vsel %vm2184, %v2189, %v2188
      %vm2191 = vcmp.lt.s32.totalorder %v2161, 0
      %v2192 = vsub.s32 0, %v2161
      %v2193 = vsel %vm2191, %v2192, %v2161
      %v2194 = vshrl.u32 %v2193, 4
      %v2195 = vand.u32 %v2193, 15
      %v2196 = vsub.s32 0, %v2195
      %v2197 = vsel %vm2191, %v2196, %v2195
      %vm2198 = vcmp.lt.s32.totalorder %v2162, 0
      %v2199 = vsub.s32 0, %v2162
      %v2200 = vsel %vm2198, %v2199, %v2162
      %v2201 = vshrl.u32 %v2200, 4
      %v2202 = vand.u32 %v2200, 15
      %v2203 = vsub.s32 0, %v2202
      %v2204 = vsel %vm2198, %v2203, %v2202
      %vm2205 = vcmp.lt.s32.totalorder %v2163, 0
      %v2206 = vsub.s32 0, %v2163
      %v2207 = vsel %vm2205, %v2206, %v2163
      %v2208 = vshrl.u32 %v2207, 4
      %v2209 = vand.u32 %v2207, 15
      %v2210 = vsub.s32 0, %v2209
      %v2211 = vsel %vm2205, %v2210, %v2209
      %vm2212 = vcmp.lt.s32.totalorder %v2164, 0
      %v2213 = vsub.s32 0, %v2164
      %v2214 = vsel %vm2212, %v2213, %v2164
      %v2215 = vshrl.u32 %v2214, 4
      %v2216 = vand.u32 %v2214, 15
      %v2217 = vsub.s32 0, %v2216
      %v2218 = vsel %vm2212, %v2217, %v2216
      %vm2219 = vcmp.lt.s32.totalorder %v2165, 0
      %v2220 = vsub.s32 0, %v2165
      %v2221 = vsel %vm2219, %v2220, %v2165
      %v2222 = vshrl.u32 %v2221, 4
      %v2223 = vand.u32 %v2221, 15
      %v2224 = vsub.s32 0, %v2223
      %v2225 = vsel %vm2219, %v2224, %v2223
      %vm2226 = vcmp.lt.s32.totalorder %v2166, 0
      %v2227 = vsub.s32 0, %v2166
      %v2228 = vsel %vm2226, %v2227, %v2166
      %v2229 = vshrl.u32 %v2228, 4
      %v2230 = vand.u32 %v2228, 15
      %v2231 = vsub.s32 0, %v2230
      %v2232 = vsel %vm2226, %v2231, %v2230
      %vm2233 = vcmp.lt.s32.totalorder %v2167, 0
      %v2234 = vsub.s32 0, %v2167
      %v2235 = vsel %vm2233, %v2234, %v2167
      %v2236 = vshrl.u32 %v2235, 4
      %v2237 = vand.u32 %v2235, 15
      %v2238 = vsub.s32 0, %v2237
      %v2239 = vsel %vm2233, %v2238, %v2237
      %vm2240 = vcmp.lt.s32.totalorder %v2168, 0
      %v2241 = vsub.s32 0, %v2168
      %v2242 = vsel %vm2240, %v2241, %v2168
      %v2243 = vshrl.u32 %v2242, 4
      %v2244 = vand.u32 %v2242, 15
      %v2245 = vsub.s32 0, %v2244
      %v2246 = vsel %vm2240, %v2245, %v2244
      %vm2247 = vcmp.lt.s32.totalorder %v2169, 0
      %v2248 = vsub.s32 0, %v2169
      %v2249 = vsel %vm2247, %v2248, %v2169
      %v2250 = vshrl.u32 %v2249, 4
      %v2251 = vand.u32 %v2249, 15
      %v2252 = vsub.s32 0, %v2251
      %v2253 = vsel %vm2247, %v2252, %v2251
      %vm2254 = vcmp.lt.s32.totalorder %v2170, 0
      %v2255 = vsub.s32 0, %v2170
      %v2256 = vsel %vm2254, %v2255, %v2170
      %v2257 = vshrl.u32 %v2256, 4
      %v2258 = vand.u32 %v2256, 15
      %v2259 = vsub.s32 0, %v2258
      %v2260 = vsel %vm2254, %v2259, %v2258
      %vm2261 = vcmp.lt.s32.totalorder %v2171, 0
      %v2262 = vsub.s32 0, %v2171
      %v2263 = vsel %vm2261, %v2262, %v2171
      %v2264 = vshrl.u32 %v2263, 4
      %v2265 = vand.u32 %v2263, 15
      %v2266 = vsub.s32 0, %v2265
      %v2267 = vsel %vm2261, %v2266, %v2265
      %vm2268 = vcmp.lt.s32.totalorder %v2172, 0
      %v2269 = vsub.s32 0, %v2172
      %v2270 = vsel %vm2268, %v2269, %v2172
      %v2271 = vshrl.u32 %v2270, 4
      %v2272 = vand.u32 %v2270, 15
      %v2273 = vsub.s32 0, %v2272
      %v2274 = vsel %vm2268, %v2273, %v2272
      %vm2275 = vcmp.lt.s32.totalorder %v2173, 0
      %v2276 = vsub.s32 0, %v2173
      %v2277 = vsel %vm2275, %v2276, %v2173
      %v2278 = vshrl.u32 %v2277, 4
      %v2279 = vand.u32 %v2277, 15
      %v2280 = vsub.s32 0, %v2279
      %v2281 = vsel %vm2275, %v2280, %v2279
      %vm2282 = vcmp.lt.s32.totalorder %v2174, 0
      %v2283 = vsub.s32 0, %v2174
      %v2284 = vsel %vm2282, %v2283, %v2174
      %v2285 = vshrl.u32 %v2284, 4
      %v2286 = vand.u32 %v2284, 15
      %v2287 = vsub.s32 0, %v2286
      %v2288 = vsel %vm2282, %v2287, %v2286
      %vm2289 = vcmp.lt.s32.totalorder %v2175, 0
      %v2290 = vsub.s32 0, %v2175
      %v2291 = vsel %vm2289, %v2290, %v2175
      %v2292 = vshrl.u32 %v2291, 4
      %v2293 = vand.u32 %v2291, 15
      %v2294 = vsub.s32 0, %v2293
      %v2295 = vsel %vm2289, %v2294, %v2293
      %vm2296 = vcmp.lt.s32.totalorder %v2176, 0
      %v2297 = vsub.s32 0, %v2176
      %v2298 = vsel %vm2296, %v2297, %v2176
      %v2299 = vshrl.u32 %v2298, 4
      %v2300 = vand.u32 %v2298, 15
      %v2301 = vsub.s32 0, %v2300
      %v2302 = vsel %vm2296, %v2301, %v2300
      %vm2303 = vcmp.lt.s32.totalorder %v2177, 0
      %v2304 = vsub.s32 0, %v2177
      %v2305 = vsel %vm2303, %v2304, %v2177
      %v2306 = vshrl.u32 %v2305, 4
      %v2307 = vand.u32 %v2305, 15
      %v2308 = vsub.s32 0, %v2307
      %v2309 = vsel %vm2303, %v2308, %v2307
      %vm2310 = vcmp.lt.s32.totalorder %v2178, 0
      %v2311 = vsub.s32 0, %v2178
      %v2312 = vsel %vm2310, %v2311, %v2178
      %v2313 = vshrl.u32 %v2312, 4
      %v2314 = vand.u32 %v2312, 15
      %v2315 = vsub.s32 0, %v2314
      %v2316 = vsel %vm2310, %v2315, %v2314
      %vm2317 = vcmp.lt.s32.totalorder %v2179, 0
      %v2318 = vsub.s32 0, %v2179
      %v2319 = vsel %vm2317, %v2318, %v2179
      %v2320 = vshrl.u32 %v2319, 4
      %v2321 = vand.u32 %v2319, 15
      %v2322 = vsub.s32 0, %v2321
      %v2323 = vsel %vm2317, %v2322, %v2321
      %vm2324 = vcmp.lt.s32.totalorder %v2180, 0
      %v2325 = vsub.s32 0, %v2180
      %v2326 = vsel %vm2324, %v2325, %v2180
      %v2327 = vshrl.u32 %v2326, 4
      %v2328 = vand.u32 %v2326, 15
      %v2329 = vsub.s32 0, %v2328
      %v2330 = vsel %vm2324, %v2329, %v2328
      %vm2331 = vcmp.lt.s32.totalorder %v2181, 0
      %v2332 = vsub.s32 0, %v2181
      %v2333 = vsel %vm2331, %v2332, %v2181
      %v2334 = vshrl.u32 %v2333, 4
      %v2335 = vand.u32 %v2333, 15
      %v2336 = vsub.s32 0, %v2335
      %v2337 = vsel %vm2331, %v2336, %v2335
      %vm2338 = vcmp.lt.s32.totalorder %v2182, 0
      %v2339 = vsub.s32 0, %v2182
      %v2340 = vsel %vm2338, %v2339, %v2182
      %v2341 = vshrl.u32 %v2340, 4
      %v2342 = vand.u32 %v2340, 15
      %v2343 = vsub.s32 0, %v2342
      %v2344 = vsel %vm2338, %v2343, %v2342
      %vm2345 = vcmp.lt.s32.totalorder %v2183, 0
      %v2346 = vsub.s32 0, %v2183
      %v2347 = vsel %vm2345, %v2346, %v2183
      %v2348 = vshrl.u32 %v2347, 4
      %v2349 = vand.u32 %v2347, 15
      %v2350 = vsub.s32 0, %v2349
      %v2351 = vsel %vm2345, %v2350, %v2349
      %vm2352 = vcmp.ne.s32.totalorder %v2190, 0
      %vm2353 = vcmp.ne.s32.totalorder %v2197, 0
      %vm2354 = vcmp.ne.s32.totalorder %v2204, 0
      %vm2355 = vcmp.ne.s32.totalorder %v2211, 0
      %vm2356 = vcmp.ne.s32.totalorder %v2218, 0
      %vm2357 = vcmp.ne.s32.totalorder %v2225, 0
      %vm2358 = vcmp.ne.s32.totalorder %v2232, 0
      %vm2359 = vcmp.ne.s32.totalorder %v2239, 0
      %vm2360 = vcmp.ne.s32.totalorder %v2246, 0
      %vm2361 = vcmp.ne.s32.totalorder %v2253, 0
      %vm2362 = vcmp.ne.s32.totalorder %v2260, 0
      %vm2363 = vcmp.ne.s32.totalorder %v2267, 0
      %vm2364 = vcmp.ne.s32.totalorder %v2274, 0
      %vm2365 = vcmp.ne.s32.totalorder %v2281, 0
      %vm2366 = vcmp.ne.s32.totalorder %v2288, 0
      %vm2367 = vcmp.ne.s32.totalorder %v2295, 0
      %vm2368 = vcmp.ne.s32.totalorder %v2302, 0
      %vm2369 = vcmp.ne.s32.totalorder %v2309, 0
      %vm2370 = vcmp.ne.s32.totalorder %v2316, 0
      %vm2371 = vcmp.ne.s32.totalorder %v2323, 0
      %vm2372 = vcmp.ne.s32.totalorder %v2330, 0
      %vm2373 = vcmp.ne.s32.totalorder %v2337, 0
      %vm2374 = vcmp.ne.s32.totalorder %v2344, 0
      %vm2375 = vcmp.ne.s32.totalorder %v2351, 0
      %vm2376 = vcmp.lt.s32.totalorder %v2190, 0
      %vm2377 = vcmp.lt.s32.totalorder %v2197, 0
      %vm2378 = vcmp.lt.s32.totalorder %v2204, 0
      %vm2379 = vcmp.lt.s32.totalorder %v2211, 0
      %vm2380 = vcmp.lt.s32.totalorder %v2218, 0
      %vm2381 = vcmp.lt.s32.totalorder %v2225, 0
      %vm2382 = vcmp.lt.s32.totalorder %v2232, 0
      %vm2383 = vcmp.lt.s32.totalorder %v2239, 0
      %vm2384 = vcmp.lt.s32.totalorder %v2246, 0
      %vm2385 = vcmp.lt.s32.totalorder %v2253, 0
      %vm2386 = vcmp.lt.s32.totalorder %v2260, 0
      %vm2387 = vcmp.lt.s32.totalorder %v2267, 0
      %vm2388 = vcmp.lt.s32.totalorder %v2274, 0
      %vm2389 = vcmp.lt.s32.totalorder %v2281, 0
      %vm2390 = vcmp.lt.s32.totalorder %v2288, 0
      %vm2391 = vcmp.lt.s32.totalorder %v2295, 0
      %vm2392 = vcmp.lt.s32.totalorder %v2302, 0
      %vm2393 = vcmp.lt.s32.totalorder %v2309, 0
      %vm2394 = vcmp.lt.s32.totalorder %v2316, 0
      %vm2395 = vcmp.lt.s32.totalorder %v2323, 0
      %vm2396 = vcmp.lt.s32.totalorder %v2330, 0
      %vm2397 = vcmp.lt.s32.totalorder %v2337, 0
      %vm2398 = vcmp.lt.s32.totalorder %v2344, 0
      %vm2399 = vcmp.lt.s32.totalorder %v2351, 0
      %vm2400 = vmand %vm2376, %vm2352
      %vm2401 = vmand %vm2377, %vm2353
      %vm2402 = vmand %vm2378, %vm2354
      %vm2403 = vmand %vm2379, %vm2355
      %vm2404 = vmand %vm2380, %vm2356
      %vm2405 = vmand %vm2381, %vm2357
      %vm2406 = vmand %vm2382, %vm2358
      %vm2407 = vmand %vm2383, %vm2359
      %vm2408 = vmand %vm2384, %vm2360
      %vm2409 = vmand %vm2385, %vm2361
      %vm2410 = vmand %vm2386, %vm2362
      %vm2411 = vmand %vm2387, %vm2363
      %vm2412 = vmand %vm2388, %vm2364
      %vm2413 = vmand %vm2389, %vm2365
      %vm2414 = vmand %vm2390, %vm2366
      %vm2415 = vmand %vm2391, %vm2367
      %vm2416 = vmand %vm2392, %vm2368
      %vm2417 = vmand %vm2393, %vm2369
      %vm2418 = vmand %vm2394, %vm2370
      %vm2419 = vmand %vm2395, %vm2371
      %vm2420 = vmand %vm2396, %vm2372
      %vm2421 = vmand %vm2397, %vm2373
      %vm2422 = vmand %vm2398, %vm2374
      %vm2423 = vmand %vm2399, %vm2375
      %v2424 = vadd.s32 %v2190, 16
      %v2425 = vadd.s32 %v2197, 16
      %v2426 = vadd.s32 %v2204, 16
      %v2427 = vadd.s32 %v2211, 16
      %v2428 = vadd.s32 %v2218, 16
      %v2429 = vadd.s32 %v2225, 16
      %v2430 = vadd.s32 %v2232, 16
      %v2431 = vadd.s32 %v2239, 16
      %v2432 = vadd.s32 %v2246, 16
      %v2433 = vadd.s32 %v2253, 16
      %v2434 = vadd.s32 %v2260, 16
      %v2435 = vadd.s32 %v2267, 16
      %v2436 = vadd.s32 %v2274, 16
      %v2437 = vadd.s32 %v2281, 16
      %v2438 = vadd.s32 %v2288, 16
      %v2439 = vadd.s32 %v2295, 16
      %v2440 = vadd.s32 %v2302, 16
      %v2441 = vadd.s32 %v2309, 16
      %v2442 = vadd.s32 %v2316, 16
      %v2443 = vadd.s32 %v2323, 16
      %v2444 = vadd.s32 %v2330, 16
      %v2445 = vadd.s32 %v2337, 16
      %v2446 = vadd.s32 %v2344, 16
      %v2447 = vadd.s32 %v2351, 16
      %v2448 = vsel %vm2400, %v2424, %v2190
      %v2449 = vsel %vm2401, %v2425, %v2197
      %v2450 = vsel %vm2402, %v2426, %v2204
      %v2451 = vsel %vm2403, %v2427, %v2211
      %v2452 = vsel %vm2404, %v2428, %v2218
      %v2453 = vsel %vm2405, %v2429, %v2225
      %v2454 = vsel %vm2406, %v2430, %v2232
      %v2455 = vsel %vm2407, %v2431, %v2239
      %v2456 = vsel %vm2408, %v2432, %v2246
      %v2457 = vsel %vm2409, %v2433, %v2253
      %v2458 = vsel %vm2410, %v2434, %v2260
      %v2459 = vsel %vm2411, %v2435, %v2267
      %v2460 = vsel %vm2412, %v2436, %v2274
      %v2461 = vsel %vm2413, %v2437, %v2281
      %v2462 = vsel %vm2414, %v2438, %v2288
      %v2463 = vsel %vm2415, %v2439, %v2295
      %v2464 = vsel %vm2416, %v2440, %v2302
      %v2465 = vsel %vm2417, %v2441, %v2309
      %v2466 = vsel %vm2418, %v2442, %v2316
      %v2467 = vsel %vm2419, %v2443, %v2323
      %v2468 = vsel %vm2420, %v2444, %v2330
      %v2469 = vsel %vm2421, %v2445, %v2337
      %v2470 = vsel %vm2422, %v2446, %v2344
      %v2471 = vsel %vm2423, %v2447, %v2351
      %vm2472 = vcmp.lt.s32.totalorder %v2448, 12
      %vm2473 = vcmp.lt.s32.totalorder %v2449, 12
      %vm2474 = vcmp.lt.s32.totalorder %v2450, 12
      %vm2475 = vcmp.lt.s32.totalorder %v2451, 12
      %vm2476 = vcmp.lt.s32.totalorder %v2452, 12
      %vm2477 = vcmp.lt.s32.totalorder %v2453, 12
      %vm2478 = vcmp.lt.s32.totalorder %v2454, 12
      %vm2479 = vcmp.lt.s32.totalorder %v2455, 12
      %vm2480 = vcmp.lt.s32.totalorder %v2456, 12
      %vm2481 = vcmp.lt.s32.totalorder %v2457, 12
      %vm2482 = vcmp.lt.s32.totalorder %v2458, 12
      %vm2483 = vcmp.lt.s32.totalorder %v2459, 12
      %vm2484 = vcmp.lt.s32.totalorder %v2460, 12
      %vm2485 = vcmp.lt.s32.totalorder %v2461, 12
      %vm2486 = vcmp.lt.s32.totalorder %v2462, 12
      %vm2487 = vcmp.lt.s32.totalorder %v2463, 12
      %vm2488 = vcmp.lt.s32.totalorder %v2464, 12
      %vm2489 = vcmp.lt.s32.totalorder %v2465, 12
      %vm2490 = vcmp.lt.s32.totalorder %v2466, 12
      %vm2491 = vcmp.lt.s32.totalorder %v2467, 12
      %vm2492 = vcmp.lt.s32.totalorder %v2468, 12
      %vm2493 = vcmp.lt.s32.totalorder %v2469, 12
      %vm2494 = vcmp.lt.s32.totalorder %v2470, 12
      %vm2495 = vcmp.lt.s32.totalorder %v2471, 12
      %v2496 = vsel %vm2472, 1, 0
      %v2497 = vsel %vm2473, 1, 0
      %v2498 = vsel %vm2474, 1, 0
      %v2499 = vsel %vm2475, 1, 0
      %v2500 = vsel %vm2476, 1, 0
      %v2501 = vsel %vm2477, 1, 0
      %v2502 = vsel %vm2478, 1, 0
      %v2503 = vsel %vm2479, 1, 0
      %v2504 = vsel %vm2480, 1, 0
      %v2505 = vsel %vm2481, 1, 0
      %v2506 = vsel %vm2482, 1, 0
      %v2507 = vsel %vm2483, 1, 0
      %v2508 = vsel %vm2484, 1, 0
      %v2509 = vsel %vm2485, 1, 0
      %v2510 = vsel %vm2486, 1, 0
      %v2511 = vsel %vm2487, 1, 0
      %v2512 = vsel %vm2488, 1, 0
      %v2513 = vsel %vm2489, 1, 0
      %v2514 = vsel %vm2490, 1, 0
      %v2515 = vsel %vm2491, 1, 0
      %v2516 = vsel %vm2492, 1, 0
      %v2517 = vsel %vm2493, 1, 0
      %v2518 = vsel %vm2494, 1, 0
      %v2519 = vsel %vm2495, 1, 0
      %v2520 = vcvt.s32.f32 %v2496
      %v2521 = vcvt.s32.f32 %v2497
      %v2522 = vcvt.s32.f32 %v2498
      %v2523 = vcvt.s32.f32 %v2499
      %v2524 = vcvt.s32.f32 %v2500
      %v2525 = vcvt.s32.f32 %v2501
      %v2526 = vcvt.s32.f32 %v2502
      %v2527 = vcvt.s32.f32 %v2503
      %v2528 = vcvt.s32.f32 %v2504
      %v2529 = vcvt.s32.f32 %v2505
      %v2530 = vcvt.s32.f32 %v2506
      %v2531 = vcvt.s32.f32 %v2507
      %v2532 = vcvt.s32.f32 %v2508
      %v2533 = vcvt.s32.f32 %v2509
      %v2534 = vcvt.s32.f32 %v2510
      %v2535 = vcvt.s32.f32 %v2511
      %v2536 = vcvt.s32.f32 %v2512
      %v2537 = vcvt.s32.f32 %v2513
      %v2538 = vcvt.s32.f32 %v2514
      %v2539 = vcvt.s32.f32 %v2515
      %v2540 = vcvt.s32.f32 %v2516
      %v2541 = vcvt.s32.f32 %v2517
      %v2542 = vcvt.s32.f32 %v2518
      %v2543 = vcvt.s32.f32 %v2519
      %v2544 = vmul.f32 %v2087, %v2520
      %v2545 = vmul.f32 %v2088, %v2521
      %v2546 = vmul.f32 %v2089, %v2522
      %v2547 = vmul.f32 %v2090, %v2523
      %v2548 = vmul.f32 %v2091, %v2524
      %v2549 = vmul.f32 %v2092, %v2525
      %v2550 = vmul.f32 %v2093, %v2526
      %v2551 = vmul.f32 %v2094, %v2527
      %v2552 = vmul.f32 %v2095, %v2528
      %v2553 = vmul.f32 %v2096, %v2529
      %v2554 = vmul.f32 %v2097, %v2530
      %v2555 = vmul.f32 %v2098, %v2531
      %v2556 = vmul.f32 %v2099, %v2532
      %v2557 = vmul.f32 %v2100, %v2533
      %v2558 = vmul.f32 %v2101, %v2534
      %v2559 = vmul.f32 %v2102, %v2535
      %v2560 = vmul.f32 %v2103, %v2536
      %v2561 = vmul.f32 %v2104, %v2537
      %v2562 = vmul.f32 %v2105, %v2538
      %v2563 = vmul.f32 %v2106, %v2539
      %v2564 = vmul.f32 %v2107, %v2540
      %v2565 = vmul.f32 %v2108, %v2541
      %v2566 = vmul.f32 %v2109, %v2542
      %v2567 = vmul.f32 %v2110, %v2543
      %v2568 = vadd.f32 %v2544, %v2545
      %v2569 = vadd.f32 %v2568, %v2546
      %v2570 = vadd.f32 %v2569, %v2547
      %v2571 = vadd.f32 %v2570, %v2548
      %v2572 = vadd.f32 %v2571, %v2549
      %v2573 = vadd.f32 %v2572, %v2550
      %v2574 = vadd.f32 %v2573, %v2551
      %v2575 = vadd.f32 %v2574, %v2552
      %v2576 = vadd.f32 %v2575, %v2553
      %v2577 = vadd.f32 %v2576, %v2554
      %v2578 = vadd.f32 %v2577, %v2555
      %v2579 = vadd.f32 %v2578, %v2556
      %v2580 = vadd.f32 %v2579, %v2557
      %v2581 = vadd.f32 %v2580, %v2558
      %v2582 = vadd.f32 %v2581, %v2559
      %v2583 = vadd.f32 %v2582, %v2560
      %v2584 = vadd.f32 %v2583, %v2561
      %v2585 = vadd.f32 %v2584, %v2562
      %v2586 = vadd.f32 %v2585, %v2563
      %v2587 = vadd.f32 %v2586, %v2564
      %v2588 = vadd.f32 %v2587, %v2565
      %v2589 = vadd.f32 %v2588, %v2566
      %v2590 = vadd.f32 %v2589, %v2567
      %v2591 = vrot.slane %v2590, 4
      %v2592 = vadd.f32 %v2590, %v2591
      %v2593 = vrot.slane %v2592, 2
      %v2594 = vadd.f32 %v2592, %v2593
      %v2595 = vrot.slane %v2594, 1
      %v2596 = vadd.f32 %v2594, %v2595
      %v2597 = vmul.f32 %v2544, %v2544
      %v2598 = vmul.f32 %v2545, %v2545
      %v2599 = vmul.f32 %v2546, %v2546
      %v2600 = vmul.f32 %v2547, %v2547
      %v2601 = vmul.f32 %v2548, %v2548
      %v2602 = vmul.f32 %v2549, %v2549
      %v2603 = vmul.f32 %v2550, %v2550
      %v2604 = vmul.f32 %v2551, %v2551
      %v2605 = vmul.f32 %v2552, %v2552
      %v2606 = vmul.f32 %v2553, %v2553
      %v2607 = vmul.f32 %v2554, %v2554
      %v2608 = vmul.f32 %v2555, %v2555
      %v2609 = vmul.f32 %v2556, %v2556
      %v2610 = vmul.f32 %v2557, %v2557
      %v2611 = vmul.f32 %v2558, %v2558
      %v2612 = vmul.f32 %v2559, %v2559
      %v2613 = vmul.f32 %v2560, %v2560
      %v2614 = vmul.f32 %v2561, %v2561
      %v2615 = vmul.f32 %v2562, %v2562
      %v2616 = vmul.f32 %v2563, %v2563
      %v2617 = vmul.f32 %v2564, %v2564
      %v2618 = vmul.f32 %v2565, %v2565
      %v2619 = vmul.f32 %v2566, %v2566
      %v2620 = vmul.f32 %v2567, %v2567
      %v2621 = vadd.f32 %v2597, %v2598
      %v2622 = vadd.f32 %v2621, %v2599
      %v2623 = vadd.f32 %v2622, %v2600
      %v2624 = vadd.f32 %v2623, %v2601
      %v2625 = vadd.f32 %v2624, %v2602
      %v2626 = vadd.f32 %v2625, %v2603
      %v2627 = vadd.f32 %v2626, %v2604
      %v2628 = vadd.f32 %v2627, %v2605
      %v2629 = vadd.f32 %v2628, %v2606
      %v2630 = vadd.f32 %v2629, %v2607
      %v2631 = vadd.f32 %v2630, %v2608
      %v2632 = vadd.f32 %v2631, %v2609
      %v2633 = vadd.f32 %v2632, %v2610
      %v2634 = vadd.f32 %v2633, %v2611
      %v2635 = vadd.f32 %v2634, %v2612
      %v2636 = vadd.f32 %v2635, %v2613
      %v2637 = vadd.f32 %v2636, %v2614
      %v2638 = vadd.f32 %v2637, %v2615
      %v2639 = vadd.f32 %v2638, %v2616
      %v2640 = vadd.f32 %v2639, %v2617
      %v2641 = vadd.f32 %v2640, %v2618
      %v2642 = vadd.f32 %v2641, %v2619
      %v2643 = vadd.f32 %v2642, %v2620
      %v2644 = vrot.slane %v2643, 4
      %v2645 = vadd.f32 %v2643, %v2644
      %v2646 = vrot.slane %v2645, 2
      %v2647 = vadd.f32 %v2645, %v2646
      %v2648 = vrot.slane %v2647, 1
      %v2649 = vadd.f32 %v2647, %v2648
      %vm2650 = vcmask 1040384
      %v2651 = vsel %vm2650, %v2596, %v2649
      %2652 = vst [vmem:[%s208] sm:$0x3] %v2651
      %p2653 = scmp.lt.s32.totalorder %s16, 1
      %s2654 = scalar_select %p2653, %s16, 1
      %s2655 = smul.addr %s2654, 24
      %s2656 = smul.addr %s2655, 4
      %s2657 = scalar_lea.vmem %s3, %s2656
      %p2658 = scmp.lt.s32.totalorder %s16, 1
      %s2659 = scalar_select %p2658, %s16, 1
      %s2660 = smul.addr %s2659, 2
      %s2661 = scalar_lea.vmem %s4, %s2660
      // Predicated region
      $region33: #{layer2_forward.1} parent=31 // pred_check
        %p2662 = pneg %p102
      $region34: #{layer2_forward.1} parent=31 // pred_check_branch
        %2664 = sbr.rel (%p2662) target = $region36
      $region35: #{layer2_forward.1} parent=31 // pred_region
        _
      $region36: #{layer2_forward.1} parent=31 // pred_fallthru
        _
      // Predicated region
      $region37: #{layer2_forward.1} parent=31 // pred_check
        %p2665 = pneg %p128
      $region38: #{layer2_forward.1} parent=31 // pred_check_branch
        %2667 = sbr.rel (%p2665) target = $region40
      $region39: #{layer2_forward.1} parent=31 // pred_region
        _
      $region40: #{layer2_forward.1} parent=31 // pred_fallthru
        _
    $region32: #{layer2_forward.1} parent=5 // pred_fallthru
      _
    %p2668 = scmp.le.s32.totalorder 2, %s11
    // Predicated region
    $region41: #{layer2_forward.1} parent=5 // pred_check
      %p2669 = pneg %p2668
    $region42: #{layer2_forward.1} parent=5 // pred_check_branch
      %2671 = sbr.rel (%p2669) target = $region44
    $region43: #{layer2_forward.1} parent=5 // pred_region
      %s2672 = ssub.s32 %s11, 2
      // Predicated region
      $region45: #{layer2_forward.1} parent=43 // pred_check
        %p2673 = pneg %p108
      $region46: #{layer2_forward.1} parent=43 // pred_check_branch
        %2675 = sbr.rel (%p2673) target = $region48
      $region47: #{layer2_forward.1} parent=43 // pred_region
        %p2676 = scmp.lt.s32.totalorder %s17, 1
        %s2677 = scalar_select %p2676, %s17, 1
        %s2678 = smul.addr %s2677, 24
        %s2679 = smul.addr %s2678, 4
        %s2680 = scalar_lea.vmem %s3, %s2679
      $region48: #{layer2_forward.1} parent=43 // pred_fallthru
        _
      // Predicated region
      $region49: #{layer2_forward.1} parent=43 // pred_check
        %p2681 = pneg %p134
      $region50: #{layer2_forward.1} parent=43 // pred_check_branch
        %2683 = sbr.rel (%p2681) target = $region52
      $region51: #{layer2_forward.1} parent=43 // pred_region
        %p2684 = scmp.lt.s32.totalorder %s17, 1
        %s2685 = scalar_select %p2684, %s17, 1
        %s2686 = smul.addr %s2685, 2
        %s2687 = scalar_lea.vmem %s4, %s2686
      $region52: #{layer2_forward.1} parent=43 // pred_fallthru
        _
    $region44: #{layer2_forward.1} parent=5 // pred_fallthru
      _
  $region6: #{layer2_forward.1} parent=0 // loop_footer
    %s15 = sadd.s32 1, %s11
  $region7: #{layer2_forward.1} parent=0 // loop_footer_branch
    %10 = sbr.rel target = $region3
  $region8: #{layer2_forward.1} parent=0 // loop_exit
    _

</llo_original>
